<compile_context>
chip_gen: v7x
topology: tpu7x:2x2x1
jax: 0.10.0
libtpu: 0.0.40
codegen_flags: <defaults>
</compile_context>

<pallas_src>
import functools

import jax
import jax.numpy as jnp
from jax.experimental import pallas as pl
from jax.experimental.pallas import tpu as pltpu

# ---------------- configuration (small shapes consistent with the module) ----------
X_SIZE = 6
Z_SIZE = 4
PRED_DIM = 2
HIDDEN = 32          # decoder_hidden_size (small for the demo; module default is 64)
K = 16               # gmm_components
LOG_SIGMA_MIN = -10.0
LOG_SIGMA_MAX = 10.0

N_Z_SAMPLES = 4      # args.n_z_samples_pred
N_PRED_STEPS = 4     # args.n_pred_steps
BATCH = 2
SEQ_LEN = 8

DZX = Z_SIZE + X_SIZE              # zx width
DIN = DZX + PRED_DIM               # lstm-cell input width
N_ROWS = N_Z_SAMPLES * BATCH       # rows fed through the recurrence


# ---------------- kernel ------------------------------------------------------------
def _decoder_kernel(zx_ref, tp_ref,           # (N, DZX), (N, 2)
                    wpre_ref, bpre_ref,       # fused [Wh|Wc|Wih_zx]: (DZX, 6H), (1, 6H)
                    wih_y_ref,                # W_ih rows for y:      (2, 4H)
                    whhwg_ref, bg_ref,        # fused [W_hh|W_gmm]:   (H, 4H+6K), (1, 6K)
                    gum_ref, eps_ref,         # gumbel: (N, T*K), normals: (N, 2*T)
                    y_ref):                   # out: (N, T*2) lane-dense
    H = HIDDEN
    G4 = 4 * H

    zx = zx_ref[...]                                                    # (N, DZX)

    # ---- prologue: ONE fused matmul gives [h0 | c0 | loop-invariant zx gate term]
    pre = (jnp.dot(zx, wpre_ref[...], preferred_element_type=jnp.float32)
           + bpre_ref[...])                                             # (N, 6H)
    h = pre[:, 0:H]
    c = pre[:, H:2 * H]
    zx_gate = pre[:, 2 * H:6 * H]                                       # (N, 4H)

    wih_y = wih_y_ref[...]                                              # (2, 4H)
    w_yx = wih_y[0:1, :]
    w_yy = wih_y[1:2, :]

    # ---- loop-invariant fused recurrence RHS: read from VMEM exactly once ---------
    W = whhwg_ref[...]                                                  # (H, 4H+6K)
    bg = bg_ref[...]                                                    # (1, 6K)
    gum = gum_ref[...]                                                  # (N, T*K)
    eps = eps_ref[...]                                                  # (N, 2*T)

    # step "-1": hidden-state gate contribution for step 0 (GMM half unused)
    fused = jnp.dot(h, W, preferred_element_type=jnp.float32)
    h_gate = fused[:, 0:G4]

    # step-0 "y" input = tgt_prediction_present, carried as two (N,1) columns
    y_x = tp_ref[:, 0:1]
    y_y = tp_ref[:, 1:2]

    y_cols = []
    for t in range(N_PRED_STEPS):                                       # static unroll
        # ---- LSTMCell: gates = hoisted zx term + y term (VPU) + h term ------------
        gates = zx_gate + y_x * w_yx + y_y * w_yy + h_gate              # (N, 4H)
        s = jax.nn.sigmoid(gates)                                       # full-vreg EUP
        th = jnp.tanh(gates)                                            # full-vreg EUP
        i_g = s[:, 0:H]
        f_g = s[:, H:2 * H]
        o_g = s[:, 3 * H:4 * H]
        g_g = th[:, 2 * H:3 * H]
        c = f_g * c + i_g * g_g
        h = o_g * jnp.tanh(c)

        # ---- single fused matmul: next-step gate contribution + GMM head ----------
        fused = jnp.dot(h, W, preferred_element_type=jnp.float32)       # (N, 4H+6K)
        h_gate = fused[:, 0:G4]                                         # reused next iter
        gout = fused[:, G4:G4 + 6 * K] + bg                             # (N, 6K)

        # ---- Gumbel-max categorical over components (logsumexp not needed) --------
        logits = gout[:, 0:K] + gum[:, t * K:(t + 1) * K]
        mx = jnp.max(logits, axis=-1, keepdims=True)
        onehot = (logits >= mx).astype(jnp.float32)                     # (N, K)
        # TODO(synk): exact float ties would sum tied components' params (measure-zero).

        # ---- GMM param selection: 5 narrow lane-sliced masked reduces (no reshape) -
        m_x = jnp.sum(gout[:, 1 * K:2 * K] * onehot, axis=-1, keepdims=True)
        m_y = jnp.sum(gout[:, 2 * K:3 * K] * onehot, axis=-1, keepdims=True)
        lsx = jnp.sum(gout[:, 3 * K:4 * K] * onehot, axis=-1, keepdims=True)
        lsy = jnp.sum(gout[:, 4 * K:5 * K] * onehot, axis=-1, keepdims=True)
        rr = jnp.sum(gout[:, 5 * K:6 * K] * onehot, axis=-1, keepdims=True)

        # nonlinearities AFTER the one-hot select (exact for a one-hot mixture pick)
        s_x = jnp.exp(jnp.clip(lsx, LOG_SIGMA_MIN, LOG_SIGMA_MAX))
        s_y = jnp.exp(jnp.clip(lsy, LOG_SIGMA_MIN, LOG_SIGMA_MAX))
        rho = jnp.tanh(rr)

        # ---- correlated bivariate normal via Cholesky of precomputed normals ------
        e1 = eps[:, 2 * t:2 * t + 1]
        e2 = eps[:, 2 * t + 1:2 * t + 2]
        y_x = m_x + s_x * e1
        y_y = m_y + s_y * (rho * e1
                           + jnp.sqrt(jnp.maximum(1.0 - rho * rho, 0.0)) * e2)

        y_cols.append(y_x)
        y_cols.append(y_y)

    # single lane-dense store: columns [2t, 2t+1] hold step t
    y_ref[...] = jnp.concatenate(y_cols, axis=-1)                       # (N, T*2)


# ---------------- wrapper ------------------------------------------------------------
def decoder_forward(x, z, input_seqs, params, seed):
    """x: (B, X_SIZE), z: (N_Z_SAMPLES, B, Z_SIZE), input_seqs: (B, S, 3, 3, >=4)."""
    z2 = z.reshape(-1, z.shape[-1])                                     # (N, Z)
    x_rep = jnp.tile(x, (N_Z_SAMPLES, 1))                               # (N, X)
    zx = jnp.concatenate([z2, x_rep], axis=1).astype(jnp.float32)       # (N, DZX)

    tgt_prediction_present = input_seqs[:, -1, 1, 1, 2:4]               # (B, 2)
    tp_rep = jnp.tile(tgt_prediction_present, (N_Z_SAMPLES, 1)).astype(jnp.float32)

    # one-time weight fusion in the wrapper (outside the latency-critical kernel)
    wpre = jnp.concatenate(
        [params["wh"], params["wc"], params["wih"][:DZX, :]], axis=1)   # (DZX, 6H)
    bpre = jnp.concatenate([params["bh"], params["bc"], params["bl"]], axis=1)  # (1, 6H)
    wih_y = params["wih"][DZX:, :]                                      # (2, 4H)
    whhwg = jnp.concatenate([params["whh"], params["wg"]], axis=1)      # (H, 4H+6K)

    # sampling randomness: gumbel noise (component pick) + standard normals
    # (Box-Muller equivalent), drawn here as lane-dense 2-D arrays.
    # TODO(synk): not bit-matchable with torch's GMM2D sampler RNG.
    key = jax.random.PRNGKey(seed)
    k_gum, k_eps = jax.random.split(key)
    gum = jax.random.gumbel(k_gum, (N_ROWS, N_PRED_STEPS * K), jnp.float32)
    eps = jax.random.normal(k_eps, (N_ROWS, 2 * N_PRED_STEPS), jnp.float32)

    vmem_inputs = (zx, tp_rep, wpre, bpre, wih_y, whhwg, params["bg"], gum, eps)

    y = pl.pallas_call(
        _decoder_kernel,
        out_shape=jax.ShapeDtypeStruct((N_ROWS, N_PRED_STEPS * PRED_DIM), jnp.float32),
        in_specs=[pl.BlockSpec(memory_space=pltpu.MemorySpace.VMEM)] * len(vmem_inputs),
        out_specs=pl.BlockSpec(memory_space=pltpu.MemorySpace.VMEM),
    )(*vmem_inputs)

    # torch: stack(y, dim=1).reshape(n_z_samples, -1, n_pred_steps, pred_dim)
    sampled_future = y.reshape(N_ROWS, N_PRED_STEPS, PRED_DIM).reshape(
        N_Z_SAMPLES, -1, N_PRED_STEPS, PRED_DIM
    )
    return sampled_future


def init_params(key):
    """Deterministic synthetic parameters with the module's shapes (pre-transposed)."""
    ks = jax.random.split(key, 8)
    scale = 0.2
    p = {
        "wh": scale * jax.random.normal(ks[0], (DZX, HIDDEN), jnp.float32),
        "bh": jnp.zeros((1, HIDDEN), jnp.float32),
        "wc": scale * jax.random.normal(ks[1], (DZX, HIDDEN), jnp.float32),
        "bc": jnp.zeros((1, HIDDEN), jnp.float32),
        "wih": scale * jax.random.normal(ks[2], (DIN, 4 * HIDDEN), jnp.float32),
        "whh": scale * jax.random.normal(ks[3], (HIDDEN, 4 * HIDDEN), jnp.float32),
        "bl": 0.01 * jax.random.normal(ks[4], (1, 4 * HIDDEN), jnp.float32),
        "wg": scale * jax.random.normal(ks[5], (HIDDEN, 6 * K), jnp.float32),
        "bg": 0.01 * jax.random.normal(ks[6], (1, 6 * K), jnp.float32),
    }
    return p


if __name__ == "__main__":
    key = jax.random.PRNGKey(0)
    k_x, k_z, k_seq, k_p = jax.random.split(key, 4)

    x = jax.random.normal(k_x, (BATCH, X_SIZE), jnp.float32)
    z = jax.random.normal(k_z, (N_Z_SAMPLES, BATCH, Z_SIZE), jnp.float32)
    input_seqs = jax.random.normal(k_seq, (BATCH, SEQ_LEN, 3, 3, 6), jnp.float32)
    params = init_params(k_p)

    fwd = jax.jit(functools.partial(decoder_forward, seed=1234))
    sampled_future = fwd(x, z, input_seqs, params)
    sampled_future = jax.block_until_ready(sampled_future)

    assert sampled_future.shape == (N_Z_SAMPLES, BATCH, N_PRED_STEPS, PRED_DIM)
    assert bool(jnp.all(jnp.isfinite(sampled_future)))
    print("KERNEL_OK")
</pallas_src>

<mosaic_0001>
module attributes {stable_mosaic.version = 11 : i64} {
  func.func @_decoder_kernel(%arg0: memref<8x10xf32, #tpu.memory_space<vmem>>, %arg1: memref<8x2xf32, #tpu.memory_space<vmem>>, %arg2: memref<10x192xf32, #tpu.memory_space<vmem>>, %arg3: memref<1x192xf32, #tpu.memory_space<vmem>>, %arg4: memref<2x128xf32, #tpu.memory_space<vmem>>, %arg5: memref<32x224xf32, #tpu.memory_space<vmem>>, %arg6: memref<1x96xf32, #tpu.memory_space<vmem>>, %arg7: memref<8x64xf32, #tpu.memory_space<vmem>>, %arg8: memref<8x8xf32, #tpu.memory_space<vmem>>, %arg9: memref<8x8xf32, #tpu.memory_space<vmem>>) attributes {dimension_semantics = [], scalar_prefetch = 0 : i64, scratch_operands = 0 : i64, tpu.core_type = #tpu.core_type<tc>} {
    %c0 = arith.constant 0 : index
    %c0_0 = arith.constant 0 : index
    %0 = vector.load %arg0[%c0, %c0_0] : memref<8x10xf32, #tpu.memory_space<vmem>>, vector<8x10xf32>
    %c0_1 = arith.constant 0 : index
    %c0_2 = arith.constant 0 : index
    %1 = vector.load %arg2[%c0_1, %c0_2] : memref<10x192xf32, #tpu.memory_space<vmem>>, vector<10x192xf32>
    %cst = arith.constant dense<0.000000e+00> : vector<8x192xf32>
    %2 = tpu.matmul %0, %1, %cst {dimension_numbers = #tpu.dot_dimension_numbers<[1], [0], [0], [1], [0, 0, 1, 1], [], []>} : vector<8x10xf32>, vector<10x192xf32>, vector<8x192xf32> -> vector<8x192xf32>
    %c0_3 = arith.constant 0 : index
    %c0_4 = arith.constant 0 : index
    %3 = vector.load %arg3[%c0_3, %c0_4] : memref<1x192xf32, #tpu.memory_space<vmem>>, vector<1x192xf32>
    %4 = vector.broadcast %3 : vector<1x192xf32> to vector<8x192xf32>
    %5 = arith.addf %2, %4 : vector<8x192xf32>
    %6 = vector.extract_strided_slice %5 {offsets = [0, 0], sizes = [8, 32], strides = [1, 1]} : vector<8x192xf32> to vector<8x32xf32>
    %7 = vector.extract_strided_slice %5 {offsets = [0, 32], sizes = [8, 32], strides = [1, 1]} : vector<8x192xf32> to vector<8x32xf32>
    %8 = vector.extract_strided_slice %5 {offsets = [0, 64], sizes = [8, 128], strides = [1, 1]} : vector<8x192xf32> to vector<8x128xf32>
    %c0_5 = arith.constant 0 : index
    %c0_6 = arith.constant 0 : index
    %9 = vector.load %arg4[%c0_5, %c0_6] : memref<2x128xf32, #tpu.memory_space<vmem>>, vector<2x128xf32>
    %10 = vector.extract_strided_slice %9 {offsets = [0, 0], sizes = [1, 128], strides = [1, 1]} : vector<2x128xf32> to vector<1x128xf32>
    %11 = vector.extract_strided_slice %9 {offsets = [1, 0], sizes = [1, 128], strides = [1, 1]} : vector<2x128xf32> to vector<1x128xf32>
    %c0_7 = arith.constant 0 : index
    %c0_8 = arith.constant 0 : index
    %12 = vector.load %arg5[%c0_7, %c0_8] : memref<32x224xf32, #tpu.memory_space<vmem>>, vector<32x224xf32>
    %c0_9 = arith.constant 0 : index
    %c0_10 = arith.constant 0 : index
    %13 = vector.load %arg6[%c0_9, %c0_10] : memref<1x96xf32, #tpu.memory_space<vmem>>, vector<1x96xf32>
    %c0_11 = arith.constant 0 : index
    %c0_12 = arith.constant 0 : index
    %14 = vector.load %arg7[%c0_11, %c0_12] : memref<8x64xf32, #tpu.memory_space<vmem>>, vector<8x64xf32>
    %c0_13 = arith.constant 0 : index
    %c0_14 = arith.constant 0 : index
    %15 = vector.load %arg8[%c0_13, %c0_14] : memref<8x8xf32, #tpu.memory_space<vmem>>, vector<8x8xf32>
    %cst_15 = arith.constant dense<0.000000e+00> : vector<8x224xf32>
    %16 = tpu.matmul %6, %12, %cst_15 {dimension_numbers = #tpu.dot_dimension_numbers<[1], [0], [0], [1], [0, 0, 1, 1], [], []>} : vector<8x32xf32>, vector<32x224xf32>, vector<8x224xf32> -> vector<8x224xf32>
    %17 = vector.extract_strided_slice %16 {offsets = [0, 0], sizes = [8, 128], strides = [1, 1]} : vector<8x224xf32> to vector<8x128xf32>
    %c0_16 = arith.constant 0 : index
    %c0_17 = arith.constant 0 : index
    %18 = vector.load %arg1[%c0_16, %c0_17] : memref<8x2xf32, #tpu.memory_space<vmem>>, vector<8x1xf32>
    %c0_18 = arith.constant 0 : index
    %c1 = arith.constant 1 : index
    %19 = vector.load %arg1[%c0_18, %c1] : memref<8x2xf32, #tpu.memory_space<vmem>>, vector<8x1xf32>
    %20 = vector.broadcast %18 : vector<8x1xf32> to vector<8x128xf32>
    %21 = vector.broadcast %10 : vector<1x128xf32> to vector<8x128xf32>
    %22 = arith.mulf %20, %21 : vector<8x128xf32>
    %23 = arith.addf %8, %22 : vector<8x128xf32>
    %24 = vector.broadcast %19 : vector<8x1xf32> to vector<8x128xf32>
    %25 = vector.broadcast %11 : vector<1x128xf32> to vector<8x128xf32>
    %26 = arith.mulf %24, %25 : vector<8x128xf32>
    %27 = arith.addf %23, %26 : vector<8x128xf32>
    %28 = arith.addf %27, %17 : vector<8x128xf32>
    %29 = arith.negf %28 : vector<8x128xf32>
    %30 = math.exp %29 : vector<8x128xf32>
    %cst_19 = arith.constant 1.000000e+00 : f32
    %31 = vector.broadcast %cst_19 : f32 to vector<8x128xf32>
    %32 = arith.addf %31, %30 : vector<8x128xf32>
    %33 = arith.divf %31, %32 : vector<8x128xf32>
    %34 = math.tanh %28 : vector<8x128xf32>
    %35 = vector.extract_strided_slice %33 {offsets = [0, 0], sizes = [8, 32], strides = [1, 1]} : vector<8x128xf32> to vector<8x32xf32>
    %36 = vector.extract_strided_slice %33 {offsets = [0, 32], sizes = [8, 32], strides = [1, 1]} : vector<8x128xf32> to vector<8x32xf32>
    %37 = vector.extract_strided_slice %33 {offsets = [0, 96], sizes = [8, 32], strides = [1, 1]} : vector<8x128xf32> to vector<8x32xf32>
    %38 = vector.extract_strided_slice %34 {offsets = [0, 64], sizes = [8, 32], strides = [1, 1]} : vector<8x128xf32> to vector<8x32xf32>
    %39 = arith.mulf %36, %7 : vector<8x32xf32>
    %40 = arith.mulf %35, %38 : vector<8x32xf32>
    %41 = arith.addf %39, %40 : vector<8x32xf32>
    %42 = math.tanh %41 : vector<8x32xf32>
    %43 = arith.mulf %37, %42 : vector<8x32xf32>
    %cst_20 = arith.constant dense<0.000000e+00> : vector<8x224xf32>
    %44 = tpu.matmul %43, %12, %cst_20 {dimension_numbers = #tpu.dot_dimension_numbers<[1], [0], [0], [1], [0, 0, 1, 1], [], []>} : vector<8x32xf32>, vector<32x224xf32>, vector<8x224xf32> -> vector<8x224xf32>
    %45 = vector.extract_strided_slice %44 {offsets = [0, 0], sizes = [8, 128], strides = [1, 1]} : vector<8x224xf32> to vector<8x128xf32>
    %46 = vector.extract_strided_slice %44 {offsets = [0, 128], sizes = [8, 96], strides = [1, 1]} : vector<8x224xf32> to vector<8x96xf32>
    %47 = vector.broadcast %13 : vector<1x96xf32> to vector<8x96xf32>
    %48 = arith.addf %46, %47 : vector<8x96xf32>
    %49 = vector.extract_strided_slice %48 {offsets = [0, 0], sizes = [8, 16], strides = [1, 1]} : vector<8x96xf32> to vector<8x16xf32>
    %50 = vector.extract_strided_slice %14 {offsets = [0, 0], sizes = [8, 16], strides = [1, 1]} : vector<8x64xf32> to vector<8x16xf32>
    %51 = arith.addf %49, %50 : vector<8x16xf32>
    %cst_21 = arith.constant dense<0xFF800000> : vector<8xf32>
    %52 = vector.multi_reduction <maximumf>, %51, %cst_21 [1] : vector<8x16xf32> to vector<8xf32>
    %53 = vector.shape_cast %52 : vector<8xf32> to vector<8x1xf32>
    %54 = vector.broadcast %53 : vector<8x1xf32> to vector<8x16xf32>
    %55 = arith.cmpf oge, %51, %54 : vector<8x16xf32>
    %56 = arith.extui %55 : vector<8x16xi1> to vector<8x16xi32>
    %57 = arith.sitofp %56 : vector<8x16xi32> to vector<8x16xf32>
    %58 = vector.extract_strided_slice %48 {offsets = [0, 16], sizes = [8, 16], strides = [1, 1]} : vector<8x96xf32> to vector<8x16xf32>
    %59 = arith.mulf %58, %57 : vector<8x16xf32>
    %cst_22 = arith.constant dense<0.000000e+00> : vector<8xf32>
    %60 = vector.multi_reduction <add>, %59, %cst_22 [1] : vector<8x16xf32> to vector<8xf32>
    %61 = vector.shape_cast %60 : vector<8xf32> to vector<8x1xf32>
    %62 = vector.extract_strided_slice %48 {offsets = [0, 32], sizes = [8, 16], strides = [1, 1]} : vector<8x96xf32> to vector<8x16xf32>
    %63 = arith.mulf %62, %57 : vector<8x16xf32>
    %cst_23 = arith.constant dense<0.000000e+00> : vector<8xf32>
    %64 = vector.multi_reduction <add>, %63, %cst_23 [1] : vector<8x16xf32> to vector<8xf32>
    %65 = vector.shape_cast %64 : vector<8xf32> to vector<8x1xf32>
    %66 = vector.extract_strided_slice %48 {offsets = [0, 48], sizes = [8, 16], strides = [1, 1]} : vector<8x96xf32> to vector<8x16xf32>
    %67 = arith.mulf %66, %57 : vector<8x16xf32>
    %cst_24 = arith.constant dense<0.000000e+00> : vector<8xf32>
    %68 = vector.multi_reduction <add>, %67, %cst_24 [1] : vector<8x16xf32> to vector<8xf32>
    %69 = vector.shape_cast %68 : vector<8xf32> to vector<8x1xf32>
    %70 = vector.extract_strided_slice %48 {offsets = [0, 64], sizes = [8, 16], strides = [1, 1]} : vector<8x96xf32> to vector<8x16xf32>
    %71 = arith.mulf %70, %57 : vector<8x16xf32>
    %cst_25 = arith.constant dense<0.000000e+00> : vector<8xf32>
    %72 = vector.multi_reduction <add>, %71, %cst_25 [1] : vector<8x16xf32> to vector<8xf32>
    %73 = vector.shape_cast %72 : vector<8xf32> to vector<8x1xf32>
    %74 = vector.extract_strided_slice %48 {offsets = [0, 80], sizes = [8, 16], strides = [1, 1]} : vector<8x96xf32> to vector<8x16xf32>
    %75 = arith.mulf %74, %57 : vector<8x16xf32>
    %cst_26 = arith.constant dense<0.000000e+00> : vector<8xf32>
    %76 = vector.multi_reduction <add>, %75, %cst_26 [1] : vector<8x16xf32> to vector<8xf32>
    %77 = vector.shape_cast %76 : vector<8xf32> to vector<8x1xf32>
    %cst_27 = arith.constant -1.000000e+01 : f32
    %cst_28 = arith.constant 1.000000e+01 : f32
    %78 = vector.broadcast %cst_27 : f32 to vector<8x1xf32>
    %79 = arith.maximumf %78, %69 : vector<8x1xf32>
    %80 = vector.broadcast %cst_28 : f32 to vector<8x1xf32>
    %81 = arith.minimumf %80, %79 : vector<8x1xf32>
    %82 = math.exp %81 : vector<8x1xf32>
    %cst_29 = arith.constant -1.000000e+01 : f32
    %cst_30 = arith.constant 1.000000e+01 : f32
    %83 = vector.broadcast %cst_29 : f32 to vector<8x1xf32>
    %84 = arith.maximumf %83, %73 : vector<8x1xf32>
    %85 = vector.broadcast %cst_30 : f32 to vector<8x1xf32>
    %86 = arith.minimumf %85, %84 : vector<8x1xf32>
    %87 = math.exp %86 : vector<8x1xf32>
    %88 = math.tanh %77 : vector<8x1xf32>
    %89 = vector.extract_strided_slice %15 {offsets = [0, 0], sizes = [8, 1], strides = [1, 1]} : vector<8x8xf32> to vector<8x1xf32>
    %90 = vector.extract_strided_slice %15 {offsets = [0, 1], sizes = [8, 1], strides = [1, 1]} : vector<8x8xf32> to vector<8x1xf32>
    %91 = arith.mulf %82, %89 : vector<8x1xf32>
    %92 = arith.addf %61, %91 : vector<8x1xf32>
    %93 = arith.mulf %88, %89 : vector<8x1xf32>
    %94 = arith.mulf %88, %88 : vector<8x1xf32>
    %cst_31 = arith.constant 1.000000e+00 : f32
    %95 = vector.broadcast %cst_31 : f32 to vector<8x1xf32>
    %96 = arith.subf %95, %94 : vector<8x1xf32>
    %cst_32 = arith.constant 0.000000e+00 : f32
    %97 = vector.broadcast %cst_32 : f32 to vector<8x1xf32>
    %98 = arith.maximumf %96, %97 : vector<8x1xf32>
    %99 = math.sqrt %98 : vector<8x1xf32>
    %100 = arith.mulf %99, %90 : vector<8x1xf32>
    %101 = arith.addf %93, %100 : vector<8x1xf32>
    %102 = arith.mulf %87, %101 : vector<8x1xf32>
    %103 = arith.addf %65, %102 : vector<8x1xf32>
    %104 = vector.broadcast %92 : vector<8x1xf32> to vector<8x128xf32>
    %105 = vector.broadcast %10 : vector<1x128xf32> to vector<8x128xf32>
    %106 = arith.mulf %104, %105 : vector<8x128xf32>
    %107 = arith.addf %8, %106 : vector<8x128xf32>
    %108 = vector.broadcast %103 : vector<8x1xf32> to vector<8x128xf32>
    %109 = vector.broadcast %11 : vector<1x128xf32> to vector<8x128xf32>
    %110 = arith.mulf %108, %109 : vector<8x128xf32>
    %111 = arith.addf %107, %110 : vector<8x128xf32>
    %112 = arith.addf %111, %45 : vector<8x128xf32>
    %113 = arith.negf %112 : vector<8x128xf32>
    %114 = math.exp %113 : vector<8x128xf32>
    %cst_33 = arith.constant 1.000000e+00 : f32
    %115 = vector.broadcast %cst_33 : f32 to vector<8x128xf32>
    %116 = arith.addf %115, %114 : vector<8x128xf32>
    %117 = arith.divf %115, %116 : vector<8x128xf32>
    %118 = math.tanh %112 : vector<8x128xf32>
    %119 = vector.extract_strided_slice %117 {offsets = [0, 0], sizes = [8, 32], strides = [1, 1]} : vector<8x128xf32> to vector<8x32xf32>
    %120 = vector.extract_strided_slice %117 {offsets = [0, 32], sizes = [8, 32], strides = [1, 1]} : vector<8x128xf32> to vector<8x32xf32>
    %121 = vector.extract_strided_slice %117 {offsets = [0, 96], sizes = [8, 32], strides = [1, 1]} : vector<8x128xf32> to vector<8x32xf32>
    %122 = vector.extract_strided_slice %118 {offsets = [0, 64], sizes = [8, 32], strides = [1, 1]} : vector<8x128xf32> to vector<8x32xf32>
    %123 = arith.mulf %120, %41 : vector<8x32xf32>
    %124 = arith.mulf %119, %122 : vector<8x32xf32>
    %125 = arith.addf %123, %124 : vector<8x32xf32>
    %126 = math.tanh %125 : vector<8x32xf32>
    %127 = arith.mulf %121, %126 : vector<8x32xf32>
    %cst_34 = arith.constant dense<0.000000e+00> : vector<8x224xf32>
    %128 = tpu.matmul %127, %12, %cst_34 {dimension_numbers = #tpu.dot_dimension_numbers<[1], [0], [0], [1], [0, 0, 1, 1], [], []>} : vector<8x32xf32>, vector<32x224xf32>, vector<8x224xf32> -> vector<8x224xf32>
    %129 = vector.extract_strided_slice %128 {offsets = [0, 0], sizes = [8, 128], strides = [1, 1]} : vector<8x224xf32> to vector<8x128xf32>
    %130 = vector.extract_strided_slice %128 {offsets = [0, 128], sizes = [8, 96], strides = [1, 1]} : vector<8x224xf32> to vector<8x96xf32>
    %131 = vector.broadcast %13 : vector<1x96xf32> to vector<8x96xf32>
    %132 = arith.addf %130, %131 : vector<8x96xf32>
    %133 = vector.extract_strided_slice %132 {offsets = [0, 0], sizes = [8, 16], strides = [1, 1]} : vector<8x96xf32> to vector<8x16xf32>
    %134 = vector.extract_strided_slice %14 {offsets = [0, 16], sizes = [8, 16], strides = [1, 1]} : vector<8x64xf32> to vector<8x16xf32>
    %135 = arith.addf %133, %134 : vector<8x16xf32>
    %cst_35 = arith.constant dense<0xFF800000> : vector<8xf32>
    %136 = vector.multi_reduction <maximumf>, %135, %cst_35 [1] : vector<8x16xf32> to vector<8xf32>
    %137 = vector.shape_cast %136 : vector<8xf32> to vector<8x1xf32>
    %138 = vector.broadcast %137 : vector<8x1xf32> to vector<8x16xf32>
    %139 = arith.cmpf oge, %135, %138 : vector<8x16xf32>
    %140 = arith.extui %139 : vector<8x16xi1> to vector<8x16xi32>
    %141 = arith.sitofp %140 : vector<8x16xi32> to vector<8x16xf32>
    %142 = vector.extract_strided_slice %132 {offsets = [0, 16], sizes = [8, 16], strides = [1, 1]} : vector<8x96xf32> to vector<8x16xf32>
    %143 = arith.mulf %142, %141 : vector<8x16xf32>
    %cst_36 = arith.constant dense<0.000000e+00> : vector<8xf32>
    %144 = vector.multi_reduction <add>, %143, %cst_36 [1] : vector<8x16xf32> to vector<8xf32>
    %145 = vector.shape_cast %144 : vector<8xf32> to vector<8x1xf32>
    %146 = vector.extract_strided_slice %132 {offsets = [0, 32], sizes = [8, 16], strides = [1, 1]} : vector<8x96xf32> to vector<8x16xf32>
    %147 = arith.mulf %146, %141 : vector<8x16xf32>
    %cst_37 = arith.constant dense<0.000000e+00> : vector<8xf32>
    %148 = vector.multi_reduction <add>, %147, %cst_37 [1] : vector<8x16xf32> to vector<8xf32>
    %149 = vector.shape_cast %148 : vector<8xf32> to vector<8x1xf32>
    %150 = vector.extract_strided_slice %132 {offsets = [0, 48], sizes = [8, 16], strides = [1, 1]} : vector<8x96xf32> to vector<8x16xf32>
    %151 = arith.mulf %150, %141 : vector<8x16xf32>
    %cst_38 = arith.constant dense<0.000000e+00> : vector<8xf32>
    %152 = vector.multi_reduction <add>, %151, %cst_38 [1] : vector<8x16xf32> to vector<8xf32>
    %153 = vector.shape_cast %152 : vector<8xf32> to vector<8x1xf32>
    %154 = vector.extract_strided_slice %132 {offsets = [0, 64], sizes = [8, 16], strides = [1, 1]} : vector<8x96xf32> to vector<8x16xf32>
    %155 = arith.mulf %154, %141 : vector<8x16xf32>
    %cst_39 = arith.constant dense<0.000000e+00> : vector<8xf32>
    %156 = vector.multi_reduction <add>, %155, %cst_39 [1] : vector<8x16xf32> to vector<8xf32>
    %157 = vector.shape_cast %156 : vector<8xf32> to vector<8x1xf32>
    %158 = vector.extract_strided_slice %132 {offsets = [0, 80], sizes = [8, 16], strides = [1, 1]} : vector<8x96xf32> to vector<8x16xf32>
    %159 = arith.mulf %158, %141 : vector<8x16xf32>
    %cst_40 = arith.constant dense<0.000000e+00> : vector<8xf32>
    %160 = vector.multi_reduction <add>, %159, %cst_40 [1] : vector<8x16xf32> to vector<8xf32>
    %161 = vector.shape_cast %160 : vector<8xf32> to vector<8x1xf32>
    %cst_41 = arith.constant -1.000000e+01 : f32
    %cst_42 = arith.constant 1.000000e+01 : f32
    %162 = vector.broadcast %cst_41 : f32 to vector<8x1xf32>
    %163 = arith.maximumf %162, %153 : vector<8x1xf32>
    %164 = vector.broadcast %cst_42 : f32 to vector<8x1xf32>
    %165 = arith.minimumf %164, %163 : vector<8x1xf32>
    %166 = math.exp %165 : vector<8x1xf32>
    %cst_43 = arith.constant -1.000000e+01 : f32
    %cst_44 = arith.constant 1.000000e+01 : f32
    %167 = vector.broadcast %cst_43 : f32 to vector<8x1xf32>
    %168 = arith.maximumf %167, %157 : vector<8x1xf32>
    %169 = vector.broadcast %cst_44 : f32 to vector<8x1xf32>
    %170 = arith.minimumf %169, %168 : vector<8x1xf32>
    %171 = math.exp %170 : vector<8x1xf32>
    %172 = math.tanh %161 : vector<8x1xf32>
    %173 = vector.extract_strided_slice %15 {offsets = [0, 2], sizes = [8, 1], strides = [1, 1]} : vector<8x8xf32> to vector<8x1xf32>
    %174 = vector.extract_strided_slice %15 {offsets = [0, 3], sizes = [8, 1], strides = [1, 1]} : vector<8x8xf32> to vector<8x1xf32>
    %175 = arith.mulf %166, %173 : vector<8x1xf32>
    %176 = arith.addf %145, %175 : vector<8x1xf32>
    %177 = arith.mulf %172, %173 : vector<8x1xf32>
    %178 = arith.mulf %172, %172 : vector<8x1xf32>
    %cst_45 = arith.constant 1.000000e+00 : f32
    %179 = vector.broadcast %cst_45 : f32 to vector<8x1xf32>
    %180 = arith.subf %179, %178 : vector<8x1xf32>
    %cst_46 = arith.constant 0.000000e+00 : f32
    %181 = vector.broadcast %cst_46 : f32 to vector<8x1xf32>
    %182 = arith.maximumf %180, %181 : vector<8x1xf32>
    %183 = math.sqrt %182 : vector<8x1xf32>
    %184 = arith.mulf %183, %174 : vector<8x1xf32>
    %185 = arith.addf %177, %184 : vector<8x1xf32>
    %186 = arith.mulf %171, %185 : vector<8x1xf32>
    %187 = arith.addf %149, %186 : vector<8x1xf32>
    %188 = vector.broadcast %176 : vector<8x1xf32> to vector<8x128xf32>
    %189 = vector.broadcast %10 : vector<1x128xf32> to vector<8x128xf32>
    %190 = arith.mulf %188, %189 : vector<8x128xf32>
    %191 = arith.addf %8, %190 : vector<8x128xf32>
    %192 = vector.broadcast %187 : vector<8x1xf32> to vector<8x128xf32>
    %193 = vector.broadcast %11 : vector<1x128xf32> to vector<8x128xf32>
    %194 = arith.mulf %192, %193 : vector<8x128xf32>
    %195 = arith.addf %191, %194 : vector<8x128xf32>
    %196 = arith.addf %195, %129 : vector<8x128xf32>
    %197 = arith.negf %196 : vector<8x128xf32>
    %198 = math.exp %197 : vector<8x128xf32>
    %cst_47 = arith.constant 1.000000e+00 : f32
    %199 = vector.broadcast %cst_47 : f32 to vector<8x128xf32>
    %200 = arith.addf %199, %198 : vector<8x128xf32>
    %201 = arith.divf %199, %200 : vector<8x128xf32>
    %202 = math.tanh %196 : vector<8x128xf32>
    %203 = vector.extract_strided_slice %201 {offsets = [0, 0], sizes = [8, 32], strides = [1, 1]} : vector<8x128xf32> to vector<8x32xf32>
    %204 = vector.extract_strided_slice %201 {offsets = [0, 32], sizes = [8, 32], strides = [1, 1]} : vector<8x128xf32> to vector<8x32xf32>
    %205 = vector.extract_strided_slice %201 {offsets = [0, 96], sizes = [8, 32], strides = [1, 1]} : vector<8x128xf32> to vector<8x32xf32>
    %206 = vector.extract_strided_slice %202 {offsets = [0, 64], sizes = [8, 32], strides = [1, 1]} : vector<8x128xf32> to vector<8x32xf32>
    %207 = arith.mulf %204, %125 : vector<8x32xf32>
    %208 = arith.mulf %203, %206 : vector<8x32xf32>
    %209 = arith.addf %207, %208 : vector<8x32xf32>
    %210 = math.tanh %209 : vector<8x32xf32>
    %211 = arith.mulf %205, %210 : vector<8x32xf32>
    %cst_48 = arith.constant dense<0.000000e+00> : vector<8x224xf32>
    %212 = tpu.matmul %211, %12, %cst_48 {dimension_numbers = #tpu.dot_dimension_numbers<[1], [0], [0], [1], [0, 0, 1, 1], [], []>} : vector<8x32xf32>, vector<32x224xf32>, vector<8x224xf32> -> vector<8x224xf32>
    %213 = vector.extract_strided_slice %212 {offsets = [0, 0], sizes = [8, 128], strides = [1, 1]} : vector<8x224xf32> to vector<8x128xf32>
    %214 = vector.extract_strided_slice %212 {offsets = [0, 128], sizes = [8, 96], strides = [1, 1]} : vector<8x224xf32> to vector<8x96xf32>
    %215 = vector.broadcast %13 : vector<1x96xf32> to vector<8x96xf32>
    %216 = arith.addf %214, %215 : vector<8x96xf32>
    %217 = vector.extract_strided_slice %216 {offsets = [0, 0], sizes = [8, 16], strides = [1, 1]} : vector<8x96xf32> to vector<8x16xf32>
    %218 = vector.extract_strided_slice %14 {offsets = [0, 32], sizes = [8, 16], strides = [1, 1]} : vector<8x64xf32> to vector<8x16xf32>
    %219 = arith.addf %217, %218 : vector<8x16xf32>
    %cst_49 = arith.constant dense<0xFF800000> : vector<8xf32>
    %220 = vector.multi_reduction <maximumf>, %219, %cst_49 [1] : vector<8x16xf32> to vector<8xf32>
    %221 = vector.shape_cast %220 : vector<8xf32> to vector<8x1xf32>
    %222 = vector.broadcast %221 : vector<8x1xf32> to vector<8x16xf32>
    %223 = arith.cmpf oge, %219, %222 : vector<8x16xf32>
    %224 = arith.extui %223 : vector<8x16xi1> to vector<8x16xi32>
    %225 = arith.sitofp %224 : vector<8x16xi32> to vector<8x16xf32>
    %226 = vector.extract_strided_slice %216 {offsets = [0, 16], sizes = [8, 16], strides = [1, 1]} : vector<8x96xf32> to vector<8x16xf32>
    %227 = arith.mulf %226, %225 : vector<8x16xf32>
    %cst_50 = arith.constant dense<0.000000e+00> : vector<8xf32>
    %228 = vector.multi_reduction <add>, %227, %cst_50 [1] : vector<8x16xf32> to vector<8xf32>
    %229 = vector.shape_cast %228 : vector<8xf32> to vector<8x1xf32>
    %230 = vector.extract_strided_slice %216 {offsets = [0, 32], sizes = [8, 16], strides = [1, 1]} : vector<8x96xf32> to vector<8x16xf32>
    %231 = arith.mulf %230, %225 : vector<8x16xf32>
    %cst_51 = arith.constant dense<0.000000e+00> : vector<8xf32>
    %232 = vector.multi_reduction <add>, %231, %cst_51 [1] : vector<8x16xf32> to vector<8xf32>
    %233 = vector.shape_cast %232 : vector<8xf32> to vector<8x1xf32>
    %234 = vector.extract_strided_slice %216 {offsets = [0, 48], sizes = [8, 16], strides = [1, 1]} : vector<8x96xf32> to vector<8x16xf32>
    %235 = arith.mulf %234, %225 : vector<8x16xf32>
    %cst_52 = arith.constant dense<0.000000e+00> : vector<8xf32>
    %236 = vector.multi_reduction <add>, %235, %cst_52 [1] : vector<8x16xf32> to vector<8xf32>
    %237 = vector.shape_cast %236 : vector<8xf32> to vector<8x1xf32>
    %238 = vector.extract_strided_slice %216 {offsets = [0, 64], sizes = [8, 16], strides = [1, 1]} : vector<8x96xf32> to vector<8x16xf32>
    %239 = arith.mulf %238, %225 : vector<8x16xf32>
    %cst_53 = arith.constant dense<0.000000e+00> : vector<8xf32>
    %240 = vector.multi_reduction <add>, %239, %cst_53 [1] : vector<8x16xf32> to vector<8xf32>
    %241 = vector.shape_cast %240 : vector<8xf32> to vector<8x1xf32>
    %242 = vector.extract_strided_slice %216 {offsets = [0, 80], sizes = [8, 16], strides = [1, 1]} : vector<8x96xf32> to vector<8x16xf32>
    %243 = arith.mulf %242, %225 : vector<8x16xf32>
    %cst_54 = arith.constant dense<0.000000e+00> : vector<8xf32>
    %244 = vector.multi_reduction <add>, %243, %cst_54 [1] : vector<8x16xf32> to vector<8xf32>
    %245 = vector.shape_cast %244 : vector<8xf32> to vector<8x1xf32>
    %cst_55 = arith.constant -1.000000e+01 : f32
    %cst_56 = arith.constant 1.000000e+01 : f32
    %246 = vector.broadcast %cst_55 : f32 to vector<8x1xf32>
    %247 = arith.maximumf %246, %237 : vector<8x1xf32>
    %248 = vector.broadcast %cst_56 : f32 to vector<8x1xf32>
    %249 = arith.minimumf %248, %247 : vector<8x1xf32>
    %250 = math.exp %249 : vector<8x1xf32>
    %cst_57 = arith.constant -1.000000e+01 : f32
    %cst_58 = arith.constant 1.000000e+01 : f32
    %251 = vector.broadcast %cst_57 : f32 to vector<8x1xf32>
    %252 = arith.maximumf %251, %241 : vector<8x1xf32>
    %253 = vector.broadcast %cst_58 : f32 to vector<8x1xf32>
    %254 = arith.minimumf %253, %252 : vector<8x1xf32>
    %255 = math.exp %254 : vector<8x1xf32>
    %256 = math.tanh %245 : vector<8x1xf32>
    %257 = vector.extract_strided_slice %15 {offsets = [0, 4], sizes = [8, 1], strides = [1, 1]} : vector<8x8xf32> to vector<8x1xf32>
    %258 = vector.extract_strided_slice %15 {offsets = [0, 5], sizes = [8, 1], strides = [1, 1]} : vector<8x8xf32> to vector<8x1xf32>
    %259 = arith.mulf %250, %257 : vector<8x1xf32>
    %260 = arith.addf %229, %259 : vector<8x1xf32>
    %261 = arith.mulf %256, %257 : vector<8x1xf32>
    %262 = arith.mulf %256, %256 : vector<8x1xf32>
    %cst_59 = arith.constant 1.000000e+00 : f32
    %263 = vector.broadcast %cst_59 : f32 to vector<8x1xf32>
    %264 = arith.subf %263, %262 : vector<8x1xf32>
    %cst_60 = arith.constant 0.000000e+00 : f32
    %265 = vector.broadcast %cst_60 : f32 to vector<8x1xf32>
    %266 = arith.maximumf %264, %265 : vector<8x1xf32>
    %267 = math.sqrt %266 : vector<8x1xf32>
    %268 = arith.mulf %267, %258 : vector<8x1xf32>
    %269 = arith.addf %261, %268 : vector<8x1xf32>
    %270 = arith.mulf %255, %269 : vector<8x1xf32>
    %271 = arith.addf %233, %270 : vector<8x1xf32>
    %272 = vector.broadcast %260 : vector<8x1xf32> to vector<8x128xf32>
    %273 = vector.broadcast %10 : vector<1x128xf32> to vector<8x128xf32>
    %274 = arith.mulf %272, %273 : vector<8x128xf32>
    %275 = arith.addf %8, %274 : vector<8x128xf32>
    %276 = vector.broadcast %271 : vector<8x1xf32> to vector<8x128xf32>
    %277 = vector.broadcast %11 : vector<1x128xf32> to vector<8x128xf32>
    %278 = arith.mulf %276, %277 : vector<8x128xf32>
    %279 = arith.addf %275, %278 : vector<8x128xf32>
    %280 = arith.addf %279, %213 : vector<8x128xf32>
    %281 = arith.negf %280 : vector<8x128xf32>
    %282 = math.exp %281 : vector<8x128xf32>
    %cst_61 = arith.constant 1.000000e+00 : f32
    %283 = vector.broadcast %cst_61 : f32 to vector<8x128xf32>
    %284 = arith.addf %283, %282 : vector<8x128xf32>
    %285 = arith.divf %283, %284 : vector<8x128xf32>
    %286 = math.tanh %280 : vector<8x128xf32>
    %287 = vector.extract_strided_slice %285 {offsets = [0, 0], sizes = [8, 32], strides = [1, 1]} : vector<8x128xf32> to vector<8x32xf32>
    %288 = vector.extract_strided_slice %285 {offsets = [0, 32], sizes = [8, 32], strides = [1, 1]} : vector<8x128xf32> to vector<8x32xf32>
    %289 = vector.extract_strided_slice %285 {offsets = [0, 96], sizes = [8, 32], strides = [1, 1]} : vector<8x128xf32> to vector<8x32xf32>
    %290 = vector.extract_strided_slice %286 {offsets = [0, 64], sizes = [8, 32], strides = [1, 1]} : vector<8x128xf32> to vector<8x32xf32>
    %291 = arith.mulf %288, %209 : vector<8x32xf32>
    %292 = arith.mulf %287, %290 : vector<8x32xf32>
    %293 = arith.addf %291, %292 : vector<8x32xf32>
    %294 = math.tanh %293 : vector<8x32xf32>
    %295 = arith.mulf %289, %294 : vector<8x32xf32>
    %cst_62 = arith.constant dense<0.000000e+00> : vector<8x224xf32>
    %296 = tpu.matmul %295, %12, %cst_62 {dimension_numbers = #tpu.dot_dimension_numbers<[1], [0], [0], [1], [0, 0, 1, 1], [], []>} : vector<8x32xf32>, vector<32x224xf32>, vector<8x224xf32> -> vector<8x224xf32>
    %297 = vector.extract_strided_slice %296 {offsets = [0, 128], sizes = [8, 96], strides = [1, 1]} : vector<8x224xf32> to vector<8x96xf32>
    %298 = vector.broadcast %13 : vector<1x96xf32> to vector<8x96xf32>
    %299 = arith.addf %297, %298 : vector<8x96xf32>
    %300 = vector.extract_strided_slice %299 {offsets = [0, 0], sizes = [8, 16], strides = [1, 1]} : vector<8x96xf32> to vector<8x16xf32>
    %301 = vector.extract_strided_slice %14 {offsets = [0, 48], sizes = [8, 16], strides = [1, 1]} : vector<8x64xf32> to vector<8x16xf32>
    %302 = arith.addf %300, %301 : vector<8x16xf32>
    %cst_63 = arith.constant dense<0xFF800000> : vector<8xf32>
    %303 = vector.multi_reduction <maximumf>, %302, %cst_63 [1] : vector<8x16xf32> to vector<8xf32>
    %304 = vector.shape_cast %303 : vector<8xf32> to vector<8x1xf32>
    %305 = vector.broadcast %304 : vector<8x1xf32> to vector<8x16xf32>
    %306 = arith.cmpf oge, %302, %305 : vector<8x16xf32>
    %307 = arith.extui %306 : vector<8x16xi1> to vector<8x16xi32>
    %308 = arith.sitofp %307 : vector<8x16xi32> to vector<8x16xf32>
    %309 = vector.extract_strided_slice %299 {offsets = [0, 16], sizes = [8, 16], strides = [1, 1]} : vector<8x96xf32> to vector<8x16xf32>
    %310 = arith.mulf %309, %308 : vector<8x16xf32>
    %cst_64 = arith.constant dense<0.000000e+00> : vector<8xf32>
    %311 = vector.multi_reduction <add>, %310, %cst_64 [1] : vector<8x16xf32> to vector<8xf32>
    %312 = vector.shape_cast %311 : vector<8xf32> to vector<8x1xf32>
    %313 = vector.extract_strided_slice %299 {offsets = [0, 32], sizes = [8, 16], strides = [1, 1]} : vector<8x96xf32> to vector<8x16xf32>
    %314 = arith.mulf %313, %308 : vector<8x16xf32>
    %cst_65 = arith.constant dense<0.000000e+00> : vector<8xf32>
    %315 = vector.multi_reduction <add>, %314, %cst_65 [1] : vector<8x16xf32> to vector<8xf32>
    %316 = vector.shape_cast %315 : vector<8xf32> to vector<8x1xf32>
    %317 = vector.extract_strided_slice %299 {offsets = [0, 48], sizes = [8, 16], strides = [1, 1]} : vector<8x96xf32> to vector<8x16xf32>
    %318 = arith.mulf %317, %308 : vector<8x16xf32>
    %cst_66 = arith.constant dense<0.000000e+00> : vector<8xf32>
    %319 = vector.multi_reduction <add>, %318, %cst_66 [1] : vector<8x16xf32> to vector<8xf32>
    %320 = vector.shape_cast %319 : vector<8xf32> to vector<8x1xf32>
    %321 = vector.extract_strided_slice %299 {offsets = [0, 64], sizes = [8, 16], strides = [1, 1]} : vector<8x96xf32> to vector<8x16xf32>
    %322 = arith.mulf %321, %308 : vector<8x16xf32>
    %cst_67 = arith.constant dense<0.000000e+00> : vector<8xf32>
    %323 = vector.multi_reduction <add>, %322, %cst_67 [1] : vector<8x16xf32> to vector<8xf32>
    %324 = vector.shape_cast %323 : vector<8xf32> to vector<8x1xf32>
    %325 = vector.extract_strided_slice %299 {offsets = [0, 80], sizes = [8, 16], strides = [1, 1]} : vector<8x96xf32> to vector<8x16xf32>
    %326 = arith.mulf %325, %308 : vector<8x16xf32>
    %cst_68 = arith.constant dense<0.000000e+00> : vector<8xf32>
    %327 = vector.multi_reduction <add>, %326, %cst_68 [1] : vector<8x16xf32> to vector<8xf32>
    %328 = vector.shape_cast %327 : vector<8xf32> to vector<8x1xf32>
    %cst_69 = arith.constant -1.000000e+01 : f32
    %cst_70 = arith.constant 1.000000e+01 : f32
    %329 = vector.broadcast %cst_69 : f32 to vector<8x1xf32>
    %330 = arith.maximumf %329, %320 : vector<8x1xf32>
    %331 = vector.broadcast %cst_70 : f32 to vector<8x1xf32>
    %332 = arith.minimumf %331, %330 : vector<8x1xf32>
    %333 = math.exp %332 : vector<8x1xf32>
    %cst_71 = arith.constant -1.000000e+01 : f32
    %cst_72 = arith.constant 1.000000e+01 : f32
    %334 = vector.broadcast %cst_71 : f32 to vector<8x1xf32>
    %335 = arith.maximumf %334, %324 : vector<8x1xf32>
    %336 = vector.broadcast %cst_72 : f32 to vector<8x1xf32>
    %337 = arith.minimumf %336, %335 : vector<8x1xf32>
    %338 = math.exp %337 : vector<8x1xf32>
    %339 = math.tanh %328 : vector<8x1xf32>
    %340 = vector.extract_strided_slice %15 {offsets = [0, 6], sizes = [8, 1], strides = [1, 1]} : vector<8x8xf32> to vector<8x1xf32>
    %341 = vector.extract_strided_slice %15 {offsets = [0, 7], sizes = [8, 1], strides = [1, 1]} : vector<8x8xf32> to vector<8x1xf32>
    %342 = arith.mulf %333, %340 : vector<8x1xf32>
    %343 = arith.addf %312, %342 : vector<8x1xf32>
    %344 = arith.mulf %339, %340 : vector<8x1xf32>
    %345 = arith.mulf %339, %339 : vector<8x1xf32>
    %cst_73 = arith.constant 1.000000e+00 : f32
    %346 = vector.broadcast %cst_73 : f32 to vector<8x1xf32>
    %347 = arith.subf %346, %345 : vector<8x1xf32>
    %cst_74 = arith.constant 0.000000e+00 : f32
    %348 = vector.broadcast %cst_74 : f32 to vector<8x1xf32>
    %349 = arith.maximumf %347, %348 : vector<8x1xf32>
    %350 = math.sqrt %349 : vector<8x1xf32>
    %351 = arith.mulf %350, %341 : vector<8x1xf32>
    %352 = arith.addf %344, %351 : vector<8x1xf32>
    %353 = arith.mulf %338, %352 : vector<8x1xf32>
    %354 = arith.addf %316, %353 : vector<8x1xf32>
    %355 = tpu.concatenate %92, %103, %176, %187, %260, %271, %343, %354 in 1 : vector<8x1xf32>, vector<8x1xf32>, vector<8x1xf32>, vector<8x1xf32>, vector<8x1xf32>, vector<8x1xf32>, vector<8x1xf32>, vector<8x1xf32> -> vector<8x8xf32>
    %c0_75 = arith.constant 0 : index
    %c0_76 = arith.constant 0 : index
    %356 = vector.load %arg9[%c0_75, %c0_76] : memref<8x8xf32, #tpu.memory_space<vmem>>, vector<8x8xf32>
    tpu.vector_store %arg9[%c0_75, %c0_76], %355 {strides = array<i32>} : memref<8x8xf32, #tpu.memory_space<vmem>>, vector<8x8xf32>,
    return
  }
}

</mosaic_0001>

<llo_original>
// kernel: decoder_forward.3
$region0: #{decoder_forward.3}
  #allocation0 [shape = 'u32[]', space=smem, size = 0x4, offset = 0x4, fixed_abs, tag = 'smem constant byte address 0x4 - core index']
  #allocation1 [shape = 'u32[144,128]{1,0:T(1,128)}', space=vmem, size = 0x12000, scoped, tag = 'internal scratch']
  %s0 = inlined_call_operand.vmem [shape: f32[8,10], index: 0, kind: input, shape index: {}]
  %s1 = inlined_call_operand.vmem [shape: f32[8,2], index: 1, kind: input, shape index: {}]
  %s2 = inlined_call_operand.vmem [shape: f32[10,192], index: 2, kind: input, shape index: {}]
  %s3 = inlined_call_operand.vmem [shape: f32[1,192], index: 3, kind: input, shape index: {}]
  %s4 = inlined_call_operand.vmem [shape: f32[2,128], index: 4, kind: input, shape index: {}]
  %s5 = inlined_call_operand.vmem [shape: f32[32,224], index: 5, kind: input, shape index: {}]
  %s6 = inlined_call_operand.vmem [shape: f32[1,96], index: 6, kind: input, shape index: {}]
  %s7 = inlined_call_operand.vmem [shape: f32[8,64], index: 7, kind: input, shape index: {}]
  %s8 = inlined_call_operand.vmem [shape: f32[8,8], index: 8, kind: input, shape index: {}]
  %s9 = inlined_call_operand.vmem [shape: f32[8,8], index: 9, kind: output, shape index: {}]
  %s10 = sld [smem:[#allocation0]]
  $region46: #{decoder_forward.3} parent=0
    _
  %s12 = ssub.s32 1, %s10
  %s13 = scalar_select 0, %s12, %s10
  // Predicated region
  $region2: #{decoder_forward.3} parent=0 // pred_check
    _
  $region3: #{decoder_forward.3} parent=0 // pred_check_branch
    %15 = sbr.rel (0) target = $region5
  $region4: #{decoder_forward.3} parent=0 // pred_region
    _
  $region5: #{decoder_forward.3} parent=0 // pred_fallthru
    _
  // Predicated region
  $region6: #{decoder_forward.3} parent=0 // pred_check
    _
  $region7: #{decoder_forward.3} parent=0 // pred_check_branch
    %17 = sbr.rel (0) target = $region9
  $region8: #{decoder_forward.3} parent=0 // pred_region
    _
  $region9: #{decoder_forward.3} parent=0 // pred_fallthru
    _
  // Predicated region
  $region10: #{decoder_forward.3} parent=0 // pred_check
    _
  $region11: #{decoder_forward.3} parent=0 // pred_check_branch
    %19 = sbr.rel (0) target = $region13
  $region12: #{decoder_forward.3} parent=0 // pred_region
    _
  $region13: #{decoder_forward.3} parent=0 // pred_fallthru
    _
  // Predicated region
  $region14: #{decoder_forward.3} parent=0 // pred_check
    _
  $region15: #{decoder_forward.3} parent=0 // pred_check_branch
    %21 = sbr.rel (0) target = $region17
  $region16: #{decoder_forward.3} parent=0 // pred_region
    _
  $region17: #{decoder_forward.3} parent=0 // pred_fallthru
    _
  // Predicated region
  $region18: #{decoder_forward.3} parent=0 // pred_check
    _
  $region19: #{decoder_forward.3} parent=0 // pred_check_branch
    %23 = sbr.rel (0) target = $region21
  $region20: #{decoder_forward.3} parent=0 // pred_region
    _
  $region21: #{decoder_forward.3} parent=0 // pred_fallthru
    _
  // Predicated region
  $region22: #{decoder_forward.3} parent=0 // pred_check
    _
  $region23: #{decoder_forward.3} parent=0 // pred_check_branch
    %25 = sbr.rel (0) target = $region25
  $region24: #{decoder_forward.3} parent=0 // pred_region
    _
  $region25: #{decoder_forward.3} parent=0 // pred_fallthru
    _
  // Predicated region
  $region26: #{decoder_forward.3} parent=0 // pred_check
    _
  $region27: #{decoder_forward.3} parent=0 // pred_check_branch
    %27 = sbr.rel (0) target = $region29
  $region28: #{decoder_forward.3} parent=0 // pred_region
    _
  $region29: #{decoder_forward.3} parent=0 // pred_fallthru
    _
  // Predicated region
  $region30: #{decoder_forward.3} parent=0 // pred_check
    _
  $region31: #{decoder_forward.3} parent=0 // pred_check_branch
    %29 = sbr.rel (0) target = $region33
  $region32: #{decoder_forward.3} parent=0 // pred_region
    _
  $region33: #{decoder_forward.3} parent=0 // pred_fallthru
    _
  // Predicated region
  $region34: #{decoder_forward.3} parent=0 // pred_check
    _
  $region35: #{decoder_forward.3} parent=0 // pred_check_branch
    %31 = sbr.rel (0) target = $region37
  $region36: #{decoder_forward.3} parent=0 // pred_region
    _
  $region37: #{decoder_forward.3} parent=0 // pred_fallthru
    _
  %v32 = vld [vmem:[%s0] sm:$0xff]
  %v33 = vld [vmem:[%s2] sm:$0xff]
  %v34 = vld [vmem:[%s2 + $0x8] sm:$0xff]
  %v35 = vld [vmem:[%s2 + $0x10] sm:$0x3]
  %v36 = vld [vmem:[%s2 + $0x18] sm:$0x3]
  %v37 = vld [vmem:[%s3] sm:$0x3]
  %v39 = vlaneseq
  %v40 = vshrl.u32 %v39, 7
  %v41 = vsub.s32 0, %v40
  %v42 = vrot.slane %v37, %v41
  %v43 = vlaneseq
  %v44 = vshrl.u32 %v43, 7
  %v45 = vsub.s32 1, %v44
  %v46 = vrot.slane %v37, %v45
  %vm49 = vcmask 80896
  %v51 = vsel %vm49, %v32, 0
  %vm53 = vcmask 1041408
  %v55 = vsel %vm53, %v35, 0
  %v58 = vsel %vm53, %v36, 0
  %60 = vmatprep.subr.mxu0 %v34
  %61 = vmatpush1.msra.mxu0 %v33
  %62 = vmatprep.subr.mxu0 %v58
  %63 = vmatpush1.msra.mxu0 %v55
  %64 = vmatprep.subr.mxu0 0.0
  %65 = vmatpush1.msra.mxu0 0.0
  %66 = vmatprep.subr.mxu0 0.0
  %67 = vmatpush1.msra.mxu0 0.0
  %68 = vmatprep.subr.mxu0 0.0
  %69 = vmatpush1.msra.mxu0 0.0
  %70 = vmatprep.subr.mxu0 0.0
  %71 = vmatpush1.msra.mxu0 0.0
  %72 = vmatprep.subr.mxu0 0.0
  %73 = vmatpush1.msra.mxu0 0.0
  %74 = vmatprep.subr.mxu0 0.0
  %75 = vmatpush1.msra.mxu0 0.0
  %76 = vmatprep.subr.mxu0 0.0
  %77 = vmatpush1.msra.mxu0 0.0
  %78 = vmatprep.subr.mxu0 0.0
  %79 = vmatpush1.msra.mxu0 0.0
  %80 = vmatprep.subr.mxu0 0.0
  %81 = vmatpush1.msra.mxu0 0.0
  %82 = vmatprep.subr.mxu0 0.0
  %83 = vmatpush1.msra.mxu0 0.0
  %84 = vmatprep.subr.mxu0 0.0
  %85 = vmatpush1.msra.mxu0 0.0
  %86 = vmatprep.subr.mxu0 0.0
  %87 = vmatpush1.msra.mxu0 0.0
  %88 = vmatprep.subr.mxu0 0.0
  %89 = vmatpush1.msra.mxu0 0.0
  %90 = vmatprep.subr.mxu0 0.0
  %91 = vmatpush1.msra.mxu0 0.0
  %92 = vmatprep.subr.mxu0 0.0
  %93 = vmatpush1.msra.mxu0 0.0
  %94 = vmatprep.subr.mxu0 0.0
  %95 = vmatpush1.msra.mxu0 0.0
  %96 = vmatprep.subr.mxu0 0.0
  %97 = vmatpush1.msra.mxu0 0.0
  %98 = vmatprep.subr.mxu0 0.0
  %99 = vmatpush1.msra.mxu0 0.0
  %100 = vmatprep.subr.mxu0 0.0
  %101 = vmatpush1.msra.mxu0 0.0
  %102 = vmatprep.subr.mxu0 0.0
  %103 = vmatpush1.msra.mxu0 0.0
  %104 = vmatprep.subr.mxu0 0.0
  %105 = vmatpush1.msra.mxu0 0.0
  %106 = vmatprep.subr.mxu0 0.0
  %107 = vmatpush1.msra.mxu0 0.0
  %108 = vmatprep.subr.mxu0 0.0
  %109 = vmatpush1.msra.mxu0 0.0
  %110 = vmatprep.subr.mxu0 0.0
  %111 = vmatpush1.msra.mxu0 0.0
  %112 = vmatprep.subr.mxu0 0.0
  %113 = vmatpush1.msra.mxu0 0.0
  %114 = vmatprep.subr.mxu0 0.0
  %115 = vmatpush1.msra.mxu0 0.0
  %116 = vmatprep.subr.mxu0 0.0
  %117 = vmatpush1.msra.mxu0 0.0
  %118 = vmatprep.subr.mxu0 0.0
  %119 = vmatpush1.msra.mxu0 0.0
  %120 = vmatprep.subr.mxu0 0.0
  %121 = vmatpush1.msra.mxu0 0.0
  %122 = vmatprep.subr.mxu0 0.0
  %123 = vmatpush1.msra.mxu0 0.0
  %124 = vmatprep.mubr.f32.mxu0 0.0
  %125 = vmatmul.mubr.f32.gmra.mrb[0].mxu0 %v51
  %v126 = vpop.f32.mrb[0].mxu0
  %v127 = vadd.f32 %v42, %v126
  %v128 = vpop.f32.mrb[0].mxu0
  %v129 = vadd.f32 %v46, %v128
  %130 = vdwg.mxu0
  %v131 = vld [vmem:[%s4] sm:$0x3]
  %v132 = vld [vmem:[%s5] sm:$0xff]
  %v133 = vld [vmem:[%s5 + $0x8] sm:$0xff]
  %v134 = vld [vmem:[%s5 + $0x10] sm:$0xff]
  %v135 = vld [vmem:[%s5 + $0x18] sm:$0xff]
  %v136 = vld [vmem:[%s5 + $0x20] sm:$0xff]
  %v137 = vld [vmem:[%s5 + $0x28] sm:$0xff]
  %v138 = vld [vmem:[%s5 + $0x30] sm:$0xff]
  %v139 = vld [vmem:[%s5 + $0x38] sm:$0xff]
  %v140 = vld [vmem:[%s6] sm:$0x1]
  %v141 = vld [vmem:[%s7] sm:$0xff]
  %v142 = vld [vmem:[%s8] sm:$0xff]
  %vm143 = vcmask 261120
  %v145 = vsel %vm143, %v127, 0
  %147 = vmatprep.subr.mxu0 %v133
  %148 = vmatpush1.msra.mxu0 %v132
  %149 = vmatprep.subr.mxu0 %v135
  %150 = vmatpush1.msra.mxu0 %v134
  %151 = vmatprep.subr.mxu0 %v137
  %152 = vmatpush1.msra.mxu0 %v136
  %153 = vmatprep.subr.mxu0 %v139
  %154 = vmatpush1.msra.mxu0 %v138
  %155 = vmatprep.subr.mxu0 0.0
  %156 = vmatpush1.msra.mxu0 0.0
  %157 = vmatprep.subr.mxu0 0.0
  %158 = vmatpush1.msra.mxu0 0.0
  %159 = vmatprep.subr.mxu0 0.0
  %160 = vmatpush1.msra.mxu0 0.0
  %161 = vmatprep.subr.mxu0 0.0
  %162 = vmatpush1.msra.mxu0 0.0
  %163 = vmatprep.subr.mxu0 0.0
  %164 = vmatpush1.msra.mxu0 0.0
  %165 = vmatprep.subr.mxu0 0.0
  %166 = vmatpush1.msra.mxu0 0.0
  %167 = vmatprep.subr.mxu0 0.0
  %168 = vmatpush1.msra.mxu0 0.0
  %169 = vmatprep.subr.mxu0 0.0
  %170 = vmatpush1.msra.mxu0 0.0
  %171 = vmatprep.subr.mxu0 0.0
  %172 = vmatpush1.msra.mxu0 0.0
  %173 = vmatprep.subr.mxu0 0.0
  %174 = vmatpush1.msra.mxu0 0.0
  %175 = vmatprep.subr.mxu0 0.0
  %176 = vmatpush1.msra.mxu0 0.0
  %177 = vmatprep.subr.mxu0 0.0
  %178 = vmatpush1.msra.mxu0 0.0
  %179 = vmatprep.subr.mxu0 0.0
  %180 = vmatpush1.msra.mxu0 0.0
  %181 = vmatprep.subr.mxu0 0.0
  %182 = vmatpush1.msra.mxu0 0.0
  %183 = vmatprep.subr.mxu0 0.0
  %184 = vmatpush1.msra.mxu0 0.0
  %185 = vmatprep.subr.mxu0 0.0
  %186 = vmatpush1.msra.mxu0 0.0
  %187 = vmatprep.subr.mxu0 0.0
  %188 = vmatpush1.msra.mxu0 0.0
  %189 = vmatprep.subr.mxu0 0.0
  %190 = vmatpush1.msra.mxu0 0.0
  %191 = vmatprep.subr.mxu0 0.0
  %192 = vmatpush1.msra.mxu0 0.0
  %193 = vmatprep.subr.mxu0 0.0
  %194 = vmatpush1.msra.mxu0 0.0
  %195 = vmatprep.subr.mxu0 0.0
  %196 = vmatpush1.msra.mxu0 0.0
  %197 = vmatprep.subr.mxu0 0.0
  %198 = vmatpush1.msra.mxu0 0.0
  %199 = vmatprep.subr.mxu0 0.0
  %200 = vmatpush1.msra.mxu0 0.0
  %201 = vmatprep.subr.mxu0 0.0
  %202 = vmatpush1.msra.mxu0 0.0
  %203 = vmatprep.subr.mxu0 0.0
  %204 = vmatpush1.msra.mxu0 0.0
  %205 = vmatprep.subr.mxu0 0.0
  %206 = vmatpush1.msra.mxu0 0.0
  %207 = vmatprep.subr.mxu0 0.0
  %208 = vmatpush1.msra.mxu0 0.0
  %209 = vmatprep.subr.mxu0 0.0
  %210 = vmatpush1.msra.mxu0 0.0
  %211 = vmatprep.mubr.f32.mxu0 0.0
  %212 = vmatmul.mubr.f32.gmra.mrb[0].mxu0 %v145
  %v213 = vpop.f32.mrb[0].mxu0
  %v214 = vadd.f32 0.0, %v213
  %v215 = vpop.f32.mrb[0].mxu0
  %216 = vdwg.mxu0
  %v217 = vld [vmem:[%s1] sm:$0xff]
  %219 = vset.pattern.permute.xlu0 0
  %220 = vperm.xlu0 %219, %v217
  %v221 = vpop.permute.xlu0 %220
  %v223 = vlaneseq
  %v224 = vshrl.u32 %v223, 7
  %v225 = vsub.s32 0, %v224
  %v226 = vrot.slane %v131, %v225
  %v227 = vmul.f32 %v221, %v226
  %229 = vrot.lane.b32.xlu0 %v227, 64
  %v230 = vpop.permute.xlu0 %229
  %v232 = vadd.f32 %v127, %v230
  %v233 = vadd.f32 %v129, %v230
  %234 = vset.pattern.permute.xlu0 1
  %235 = vperm.xlu0 %234, %v217
  %v236 = vpop.permute.xlu0 %235
  %v238 = vlaneseq
  %v239 = vshrl.u32 %v238, 7
  %v240 = vsub.s32 1, %v239
  %v241 = vrot.slane %v131, %v240
  %v242 = vmul.f32 %v236, %v241
  %244 = vrot.lane.b32.xlu0 %v242, 64
  %v245 = vpop.permute.xlu0 %244
  %v247 = vadd.f32 %v232, %v245
  %v248 = vadd.f32 %v233, %v245
  %250 = vrot.lane.b32.xlu0 %v214, 64
  %v251 = vpop.permute.xlu0 %250
  %v253 = vadd.f32 %v247, %v251
  %v254 = vadd.f32 %v248, %v251
  %v255 = vxor.u32 %v253, 2147483648
  %v256 = vxor.u32 %v254, 2147483648
  %v257 = vmul.f32 %v255, 1.442695
  %v258 = vpow.pop %v257
  %v259 = vmul.f32 %v256, 1.442695
  %v260 = vpow.pop %v259
  %v261 = vadd.f32 %v258, 1.0
  %v262 = vadd.f32 %v260, 1.0
  %v263 = vrcp.pop %v261
  %v264 = vmul.f32 1.0, %v263
  %v265 = vrcp.pop %v262
  %v266 = vmul.f32 1.0, %v265
  %v267 = vtanh.pop %v254
  %268 = vrot.lane.b32.xlu0 %v127, 64
  %v269 = vpop.permute.xlu0 %268
  %v271 = vmul.f32 %v264, %v269
  %273 = vrot.lane.b32.xlu0 %v267, 64
  %v274 = vpop.permute.xlu0 %273
  %v276 = vmul.f32 %v264, %v274
  %278 = vrot.lane.b32.xlu0 %v276, 32
  %v279 = vpop.permute.xlu0 %278
  %v281 = vadd.f32 %v271, %v279
  %v282 = vtanh.pop %v281
  %284 = vrot.lane.b32.xlu0 %v282, 64
  %v285 = vpop.permute.xlu0 %284
  %v287 = vmul.f32 %v266, %v285
  %289 = vrot.lane.b32.xlu0 %v287, 96
  %v290 = vpop.permute.xlu0 %289
  %v291 = vsel %vm143, %v290, 0
  %293 = vmatprep.subr.mxu0 %v133
  %294 = vmatpush1.msra.mxu0 %v132
  %295 = vmatprep.subr.mxu0 %v135
  %296 = vmatpush1.msra.mxu0 %v134
  %297 = vmatprep.subr.mxu0 %v137
  %298 = vmatpush1.msra.mxu0 %v136
  %299 = vmatprep.subr.mxu0 %v139
  %300 = vmatpush1.msra.mxu0 %v138
  %301 = vmatprep.subr.mxu0 0.0
  %302 = vmatpush1.msra.mxu0 0.0
  %303 = vmatprep.subr.mxu0 0.0
  %304 = vmatpush1.msra.mxu0 0.0
  %305 = vmatprep.subr.mxu0 0.0
  %306 = vmatpush1.msra.mxu0 0.0
  %307 = vmatprep.subr.mxu0 0.0
  %308 = vmatpush1.msra.mxu0 0.0
  %309 = vmatprep.subr.mxu0 0.0
  %310 = vmatpush1.msra.mxu0 0.0
  %311 = vmatprep.subr.mxu0 0.0
  %312 = vmatpush1.msra.mxu0 0.0
  %313 = vmatprep.subr.mxu0 0.0
  %314 = vmatpush1.msra.mxu0 0.0
  %315 = vmatprep.subr.mxu0 0.0
  %316 = vmatpush1.msra.mxu0 0.0
  %317 = vmatprep.subr.mxu0 0.0
  %318 = vmatpush1.msra.mxu0 0.0
  %319 = vmatprep.subr.mxu0 0.0
  %320 = vmatpush1.msra.mxu0 0.0
  %321 = vmatprep.subr.mxu0 0.0
  %322 = vmatpush1.msra.mxu0 0.0
  %323 = vmatprep.subr.mxu0 0.0
  %324 = vmatpush1.msra.mxu0 0.0
  %325 = vmatprep.subr.mxu0 0.0
  %326 = vmatpush1.msra.mxu0 0.0
  %327 = vmatprep.subr.mxu0 0.0
  %328 = vmatpush1.msra.mxu0 0.0
  %329 = vmatprep.subr.mxu0 0.0
  %330 = vmatpush1.msra.mxu0 0.0
  %331 = vmatprep.subr.mxu0 0.0
  %332 = vmatpush1.msra.mxu0 0.0
  %333 = vmatprep.subr.mxu0 0.0
  %334 = vmatpush1.msra.mxu0 0.0
  %335 = vmatprep.subr.mxu0 0.0
  %336 = vmatpush1.msra.mxu0 0.0
  %337 = vmatprep.subr.mxu0 0.0
  %338 = vmatpush1.msra.mxu0 0.0
  %339 = vmatprep.subr.mxu0 0.0
  %340 = vmatpush1.msra.mxu0 0.0
  %341 = vmatprep.subr.mxu0 0.0
  %342 = vmatpush1.msra.mxu0 0.0
  %343 = vmatprep.subr.mxu0 0.0
  %344 = vmatpush1.msra.mxu0 0.0
  %345 = vmatprep.subr.mxu0 0.0
  %346 = vmatpush1.msra.mxu0 0.0
  %347 = vmatprep.subr.mxu0 0.0
  %348 = vmatpush1.msra.mxu0 0.0
  %349 = vmatprep.subr.mxu0 0.0
  %350 = vmatpush1.msra.mxu0 0.0
  %351 = vmatprep.subr.mxu0 0.0
  %352 = vmatpush1.msra.mxu0 0.0
  %353 = vmatprep.subr.mxu0 0.0
  %354 = vmatpush1.msra.mxu0 0.0
  %355 = vmatprep.subr.mxu0 0.0
  %356 = vmatpush1.msra.mxu0 0.0
  %357 = vmatprep.mubr.f32.mxu0 0.0
  %358 = vmatmul.mubr.f32.gmra.mrb[0].mxu0 %v291
  %v359 = vpop.f32.mrb[0].mxu0
  %v360 = vadd.f32 0.0, %v359
  %v361 = vpop.f32.mrb[0].mxu0
  %v362 = vadd.f32 0.0, %v361
  %363 = vdwg.mxu0
  %v365 = vlaneseq
  %v366 = vshrl.u32 %v365, 7
  %v367 = vsub.s32 0, %v366
  %v368 = vrot.slane %v140, %v367
  %v370 = vadd.f32 %v362, %v368
  %v371 = vadd.f32 %v370, %v141
  %vm372 = vcmask 130048
  %v373 = vsel %vm372, %v371, -inf
  %374 = vmax.xlane.f32.xlu0 %v373
  %v375 = vpop.xlane.xlu0 %374
  %vm376 = vcmp.ge.f32.partialorder %v371, %v375
  %v377 = vsel %vm376, 1, 0
  %v378 = vcvt.s32.f32 %v377
  %380 = vrot.lane.b32.xlu0 %v378, 16
  %v381 = vpop.permute.xlu0 %380
  %v383 = vmul.f32 %v370, %v381
  %385 = vrot.lane.b32.xlu0 %v383, 112
  %v386 = vpop.permute.xlu0 %385
  %v388 = vsel %vm372, %v386, 0.0
  %389 = vadd.xlane.f32.xlu0 %v388
  %v390 = vpop.xlane.xlu0 %389
  %391 = vrot.lane.b32.xlu0 %v378, 32
  %v392 = vpop.permute.xlu0 %391
  %v394 = vmul.f32 %v370, %v392
  %396 = vrot.lane.b32.xlu0 %v394, 96
  %v397 = vpop.permute.xlu0 %396
  %v399 = vsel %vm372, %v397, 0.0
  %400 = vadd.xlane.f32.xlu0 %v399
  %v401 = vpop.xlane.xlu0 %400
  %402 = vrot.lane.b32.xlu0 %v378, 48
  %v403 = vpop.permute.xlu0 %402
  %v405 = vmul.f32 %v370, %v403
  %407 = vrot.lane.b32.xlu0 %v405, 80
  %v408 = vpop.permute.xlu0 %407
  %v410 = vsel %vm372, %v408, 0.0
  %411 = vadd.xlane.f32.xlu0 %v410
  %v412 = vpop.xlane.xlu0 %411
  %413 = vrot.lane.b32.xlu0 %v378, 64
  %v414 = vpop.permute.xlu0 %413
  %v416 = vmul.f32 %v370, %v414
  %418 = vrot.lane.b32.xlu0 %v416, 64
  %v419 = vpop.permute.xlu0 %418
  %v421 = vsel %vm372, %v419, 0.0
  %422 = vadd.xlane.f32.xlu0 %v421
  %v423 = vpop.xlane.xlu0 %422
  %424 = vrot.lane.b32.xlu0 %v378, 80
  %v425 = vpop.permute.xlu0 %424
  %v427 = vmul.f32 %v370, %v425
  %429 = vrot.lane.b32.xlu0 %v427, 48
  %v430 = vpop.permute.xlu0 %429
  %v432 = vsel %vm372, %v430, 0.0
  %433 = vadd.xlane.f32.xlu0 %v432
  %v434 = vpop.xlane.xlu0 %433
  %v435 = vmax.f32 %v412, -10.0
  %v436 = vmin.f32 %v435, 10.0
  %v437 = vmul.f32 %v436, 1.442695
  %v438 = vpow.pop %v437
  %v439 = vmax.f32 %v423, -10.0
  %v440 = vmin.f32 %v439, 10.0
  %v441 = vmul.f32 %v440, 1.442695
  %v442 = vpow.pop %v441
  %v443 = vtanh.pop %v434
  %v444 = vmul.f32 %v438, %v142
  %v445 = vadd.f32 %v390, %v444
  %v446 = vmul.f32 %v443, %v142
  %v447 = vmul.f32 %v443, %v443
  %v448 = vsub.f32 1.0, %v447
  %v449 = vmax.f32 %v448, 0.0
  %v450 = vrsqrt.pop %v449
  %v451 = vmul.f32 %v449, %v450
  %vm452 = vcmp.eq.f32.partialorder %v449, inf
  %v453 = vsel %vm452, %v449, %v451
  %vm454 = vcmp.eq.f32.partialorder %v449, 0.0
  %v455 = vand.u32 %v449, 2147483648
  %v456 = vsel %vm454, %v455, %v453
  %v457 = vmul.f32 %v456, %v142
  %459 = vrot.lane.b32.xlu0 %v457, 127
  %v460 = vpop.permute.xlu0 %459
  %v462 = vadd.f32 %v446, %v460
  %v463 = vmul.f32 %v442, %v462
  %v464 = vadd.f32 %v401, %v463
  %466 = vset.pattern.permute.xlu0 0
  %467 = vperm.xlu0 %466, %v445
  %v468 = vpop.permute.xlu0 %467
  %v470 = vmul.f32 %v468, %v226
  %472 = vrot.lane.b32.xlu0 %v470, 64
  %v473 = vpop.permute.xlu0 %472
  %v475 = vadd.f32 %v127, %v473
  %v476 = vadd.f32 %v129, %v473
  %478 = vset.pattern.permute.xlu0 0
  %479 = vperm.xlu0 %478, %v464
  %v480 = vpop.permute.xlu0 %479
  %v482 = vmul.f32 %v480, %v241
  %484 = vrot.lane.b32.xlu0 %v482, 64
  %v485 = vpop.permute.xlu0 %484
  %v487 = vadd.f32 %v475, %v485
  %v488 = vadd.f32 %v476, %v485
  %490 = vrot.lane.b32.xlu0 %v360, 64
  %v491 = vpop.permute.xlu0 %490
  %v493 = vadd.f32 %v487, %v491
  %v494 = vadd.f32 %v488, %v491
  %v495 = vxor.u32 %v493, 2147483648
  %v496 = vxor.u32 %v494, 2147483648
  %v497 = vmul.f32 %v495, 1.442695
  %v498 = vpow.pop %v497
  %v499 = vmul.f32 %v496, 1.442695
  %v500 = vpow.pop %v499
  %v501 = vadd.f32 %v498, 1.0
  %v502 = vadd.f32 %v500, 1.0
  %v503 = vrcp.pop %v501
  %v504 = vmul.f32 1.0, %v503
  %v505 = vrcp.pop %v502
  %v506 = vmul.f32 1.0, %v505
  %v507 = vtanh.pop %v494
  %v508 = vmul.f32 %v504, %v281
  %510 = vrot.lane.b32.xlu0 %v507, 64
  %v511 = vpop.permute.xlu0 %510
  %v513 = vmul.f32 %v504, %v511
  %515 = vrot.lane.b32.xlu0 %v513, 32
  %v516 = vpop.permute.xlu0 %515
  %v518 = vadd.f32 %v508, %v516
  %v519 = vtanh.pop %v518
  %521 = vrot.lane.b32.xlu0 %v519, 64
  %v522 = vpop.permute.xlu0 %521
  %v524 = vmul.f32 %v506, %v522
  %526 = vrot.lane.b32.xlu0 %v524, 96
  %v527 = vpop.permute.xlu0 %526
  %v528 = vsel %vm143, %v527, 0
  %530 = vmatprep.subr.mxu0 %v133
  %531 = vmatpush1.msra.mxu0 %v132
  %532 = vmatprep.subr.mxu0 %v135
  %533 = vmatpush1.msra.mxu0 %v134
  %534 = vmatprep.subr.mxu0 %v137
  %535 = vmatpush1.msra.mxu0 %v136
  %536 = vmatprep.subr.mxu0 %v139
  %537 = vmatpush1.msra.mxu0 %v138
  %538 = vmatprep.subr.mxu0 0.0
  %539 = vmatpush1.msra.mxu0 0.0
  %540 = vmatprep.subr.mxu0 0.0
  %541 = vmatpush1.msra.mxu0 0.0
  %542 = vmatprep.subr.mxu0 0.0
  %543 = vmatpush1.msra.mxu0 0.0
  %544 = vmatprep.subr.mxu0 0.0
  %545 = vmatpush1.msra.mxu0 0.0
  %546 = vmatprep.subr.mxu0 0.0
  %547 = vmatpush1.msra.mxu0 0.0
  %548 = vmatprep.subr.mxu0 0.0
  %549 = vmatpush1.msra.mxu0 0.0
  %550 = vmatprep.subr.mxu0 0.0
  %551 = vmatpush1.msra.mxu0 0.0
  %552 = vmatprep.subr.mxu0 0.0
  %553 = vmatpush1.msra.mxu0 0.0
  %554 = vmatprep.subr.mxu0 0.0
  %555 = vmatpush1.msra.mxu0 0.0
  %556 = vmatprep.subr.mxu0 0.0
  %557 = vmatpush1.msra.mxu0 0.0
  %558 = vmatprep.subr.mxu0 0.0
  %559 = vmatpush1.msra.mxu0 0.0
  %560 = vmatprep.subr.mxu0 0.0
  %561 = vmatpush1.msra.mxu0 0.0
  %562 = vmatprep.subr.mxu0 0.0
  %563 = vmatpush1.msra.mxu0 0.0
  %564 = vmatprep.subr.mxu0 0.0
  %565 = vmatpush1.msra.mxu0 0.0
  %566 = vmatprep.subr.mxu0 0.0
  %567 = vmatpush1.msra.mxu0 0.0
  %568 = vmatprep.subr.mxu0 0.0
  %569 = vmatpush1.msra.mxu0 0.0
  %570 = vmatprep.subr.mxu0 0.0
  %571 = vmatpush1.msra.mxu0 0.0
  %572 = vmatprep.subr.mxu0 0.0
  %573 = vmatpush1.msra.mxu0 0.0
  %574 = vmatprep.subr.mxu0 0.0
  %575 = vmatpush1.msra.mxu0 0.0
  %576 = vmatprep.subr.mxu0 0.0
  %577 = vmatpush1.msra.mxu0 0.0
  %578 = vmatprep.subr.mxu0 0.0
  %579 = vmatpush1.msra.mxu0 0.0
  %580 = vmatprep.subr.mxu0 0.0
  %581 = vmatpush1.msra.mxu0 0.0
  %582 = vmatprep.subr.mxu0 0.0
  %583 = vmatpush1.msra.mxu0 0.0
  %584 = vmatprep.subr.mxu0 0.0
  %585 = vmatpush1.msra.mxu0 0.0
  %586 = vmatprep.subr.mxu0 0.0
  %587 = vmatpush1.msra.mxu0 0.0
  %588 = vmatprep.subr.mxu0 0.0
  %589 = vmatpush1.msra.mxu0 0.0
  %590 = vmatprep.subr.mxu0 0.0
  %591 = vmatpush1.msra.mxu0 0.0
  %592 = vmatprep.subr.mxu0 0.0
  %593 = vmatpush1.msra.mxu0 0.0
  %594 = vmatprep.mubr.f32.mxu0 0.0
  %595 = vmatmul.mubr.f32.gmra.mrb[0].mxu0 %v528
  %v596 = vpop.f32.mrb[0].mxu0
  %v597 = vadd.f32 0.0, %v596
  %v598 = vpop.f32.mrb[0].mxu0
  %v599 = vadd.f32 0.0, %v598
  %600 = vdwg.mxu0
  %v601 = vadd.f32 %v599, %v368
  %603 = vrot.lane.b32.xlu0 %v141, 112
  %v604 = vpop.permute.xlu0 %603
  %v606 = vadd.f32 %v601, %v604
  %v607 = vsel %vm372, %v606, -inf
  %608 = vmax.xlane.f32.xlu0 %v607
  %v609 = vpop.xlane.xlu0 %608
  %vm610 = vcmp.ge.f32.partialorder %v606, %v609
  %v611 = vsel %vm610, 1, 0
  %v612 = vcvt.s32.f32 %v611
  %614 = vrot.lane.b32.xlu0 %v612, 16
  %v615 = vpop.permute.xlu0 %614
  %v617 = vmul.f32 %v601, %v615
  %619 = vrot.lane.b32.xlu0 %v617, 112
  %v620 = vpop.permute.xlu0 %619
  %v622 = vsel %vm372, %v620, 0.0
  %623 = vadd.xlane.f32.xlu0 %v622
  %v624 = vpop.xlane.xlu0 %623
  %625 = vrot.lane.b32.xlu0 %v612, 32
  %v626 = vpop.permute.xlu0 %625
  %v628 = vmul.f32 %v601, %v626
  %630 = vrot.lane.b32.xlu0 %v628, 96
  %v631 = vpop.permute.xlu0 %630
  %v633 = vsel %vm372, %v631, 0.0
  %634 = vadd.xlane.f32.xlu0 %v633
  %v635 = vpop.xlane.xlu0 %634
  %636 = vrot.lane.b32.xlu0 %v612, 48
  %v637 = vpop.permute.xlu0 %636
  %v639 = vmul.f32 %v601, %v637
  %641 = vrot.lane.b32.xlu0 %v639, 80
  %v642 = vpop.permute.xlu0 %641
  %v644 = vsel %vm372, %v642, 0.0
  %645 = vadd.xlane.f32.xlu0 %v644
  %v646 = vpop.xlane.xlu0 %645
  %647 = vrot.lane.b32.xlu0 %v612, 64
  %v648 = vpop.permute.xlu0 %647
  %v650 = vmul.f32 %v601, %v648
  %652 = vrot.lane.b32.xlu0 %v650, 64
  %v653 = vpop.permute.xlu0 %652
  %v655 = vsel %vm372, %v653, 0.0
  %656 = vadd.xlane.f32.xlu0 %v655
  %v657 = vpop.xlane.xlu0 %656
  %658 = vrot.lane.b32.xlu0 %v612, 80
  %v659 = vpop.permute.xlu0 %658
  %v661 = vmul.f32 %v601, %v659
  %663 = vrot.lane.b32.xlu0 %v661, 48
  %v664 = vpop.permute.xlu0 %663
  %v666 = vsel %vm372, %v664, 0.0
  %667 = vadd.xlane.f32.xlu0 %v666
  %v668 = vpop.xlane.xlu0 %667
  %v669 = vmax.f32 %v646, -10.0
  %v670 = vmin.f32 %v669, 10.0
  %v671 = vmul.f32 %v670, 1.442695
  %v672 = vpow.pop %v671
  %v673 = vmax.f32 %v657, -10.0
  %v674 = vmin.f32 %v673, 10.0
  %v675 = vmul.f32 %v674, 1.442695
  %v676 = vpow.pop %v675
  %v677 = vtanh.pop %v668
  %v678 = vmul.f32 %v672, %v142
  %v679 = vadd.f32 %v624, %v678
  %v680 = vmul.f32 %v677, %v142
  %v681 = vmul.f32 %v677, %v677
  %v682 = vsub.f32 1.0, %v681
  %v683 = vmax.f32 %v682, 0.0
  %v684 = vrsqrt.pop %v683
  %v685 = vmul.f32 %v683, %v684
  %vm686 = vcmp.eq.f32.partialorder %v683, inf
  %v687 = vsel %vm686, %v683, %v685
  %vm688 = vcmp.eq.f32.partialorder %v683, 0.0
  %v689 = vand.u32 %v683, 2147483648
  %v690 = vsel %vm688, %v689, %v687
  %v691 = vmul.f32 %v690, %v142
  %693 = vrot.lane.b32.xlu0 %v691, 127
  %v694 = vpop.permute.xlu0 %693
  %v696 = vadd.f32 %v680, %v694
  %v697 = vmul.f32 %v676, %v696
  %v698 = vadd.f32 %v635, %v697
  %700 = vset.pattern.permute.xlu0 2
  %701 = vperm.xlu0 %700, %v679
  %v702 = vpop.permute.xlu0 %701
  %v704 = vmul.f32 %v702, %v226
  %706 = vrot.lane.b32.xlu0 %v704, 64
  %v707 = vpop.permute.xlu0 %706
  %v709 = vadd.f32 %v127, %v707
  %v710 = vadd.f32 %v129, %v707
  %712 = vset.pattern.permute.xlu0 2
  %713 = vperm.xlu0 %712, %v698
  %v714 = vpop.permute.xlu0 %713
  %v716 = vmul.f32 %v714, %v241
  %718 = vrot.lane.b32.xlu0 %v716, 64
  %v719 = vpop.permute.xlu0 %718
  %v721 = vadd.f32 %v709, %v719
  %v722 = vadd.f32 %v710, %v719
  %724 = vrot.lane.b32.xlu0 %v597, 64
  %v725 = vpop.permute.xlu0 %724
  %v727 = vadd.f32 %v721, %v725
  %v728 = vadd.f32 %v722, %v725
  %v729 = vxor.u32 %v727, 2147483648
  %v730 = vxor.u32 %v728, 2147483648
  %v731 = vmul.f32 %v729, 1.442695
  %v732 = vpow.pop %v731
  %v733 = vmul.f32 %v730, 1.442695
  %v734 = vpow.pop %v733
  %v735 = vadd.f32 %v732, 1.0
  %v736 = vadd.f32 %v734, 1.0
  %v737 = vrcp.pop %v735
  %v738 = vmul.f32 1.0, %v737
  %v739 = vrcp.pop %v736
  %v740 = vmul.f32 1.0, %v739
  %v741 = vtanh.pop %v728
  %v742 = vmul.f32 %v738, %v518
  %744 = vrot.lane.b32.xlu0 %v741, 64
  %v745 = vpop.permute.xlu0 %744
  %v747 = vmul.f32 %v738, %v745
  %749 = vrot.lane.b32.xlu0 %v747, 32
  %v750 = vpop.permute.xlu0 %749
  %v752 = vadd.f32 %v742, %v750
  %v753 = vtanh.pop %v752
  %755 = vrot.lane.b32.xlu0 %v753, 64
  %v756 = vpop.permute.xlu0 %755
  %v758 = vmul.f32 %v740, %v756
  %760 = vrot.lane.b32.xlu0 %v758, 96
  %v761 = vpop.permute.xlu0 %760
  %v762 = vsel %vm143, %v761, 0
  %764 = vmatprep.subr.mxu0 %v133
  %765 = vmatpush1.msra.mxu0 %v132
  %766 = vmatprep.subr.mxu0 %v135
  %767 = vmatpush1.msra.mxu0 %v134
  %768 = vmatprep.subr.mxu0 %v137
  %769 = vmatpush1.msra.mxu0 %v136
  %770 = vmatprep.subr.mxu0 %v139
  %771 = vmatpush1.msra.mxu0 %v138
  %772 = vmatprep.subr.mxu0 0.0
  %773 = vmatpush1.msra.mxu0 0.0
  %774 = vmatprep.subr.mxu0 0.0
  %775 = vmatpush1.msra.mxu0 0.0
  %776 = vmatprep.subr.mxu0 0.0
  %777 = vmatpush1.msra.mxu0 0.0
  %778 = vmatprep.subr.mxu0 0.0
  %779 = vmatpush1.msra.mxu0 0.0
  %780 = vmatprep.subr.mxu0 0.0
  %781 = vmatpush1.msra.mxu0 0.0
  %782 = vmatprep.subr.mxu0 0.0
  %783 = vmatpush1.msra.mxu0 0.0
  %784 = vmatprep.subr.mxu0 0.0
  %785 = vmatpush1.msra.mxu0 0.0
  %786 = vmatprep.subr.mxu0 0.0
  %787 = vmatpush1.msra.mxu0 0.0
  %788 = vmatprep.subr.mxu0 0.0
  %789 = vmatpush1.msra.mxu0 0.0
  %790 = vmatprep.subr.mxu0 0.0
  %791 = vmatpush1.msra.mxu0 0.0
  %792 = vmatprep.subr.mxu0 0.0
  %793 = vmatpush1.msra.mxu0 0.0
  %794 = vmatprep.subr.mxu0 0.0
  %795 = vmatpush1.msra.mxu0 0.0
  %796 = vmatprep.subr.mxu0 0.0
  %797 = vmatpush1.msra.mxu0 0.0
  %798 = vmatprep.subr.mxu0 0.0
  %799 = vmatpush1.msra.mxu0 0.0
  %800 = vmatprep.subr.mxu0 0.0
  %801 = vmatpush1.msra.mxu0 0.0
  %802 = vmatprep.subr.mxu0 0.0
  %803 = vmatpush1.msra.mxu0 0.0
  %804 = vmatprep.subr.mxu0 0.0
  %805 = vmatpush1.msra.mxu0 0.0
  %806 = vmatprep.subr.mxu0 0.0
  %807 = vmatpush1.msra.mxu0 0.0
  %808 = vmatprep.subr.mxu0 0.0
  %809 = vmatpush1.msra.mxu0 0.0
  %810 = vmatprep.subr.mxu0 0.0
  %811 = vmatpush1.msra.mxu0 0.0
  %812 = vmatprep.subr.mxu0 0.0
  %813 = vmatpush1.msra.mxu0 0.0
  %814 = vmatprep.subr.mxu0 0.0
  %815 = vmatpush1.msra.mxu0 0.0
  %816 = vmatprep.subr.mxu0 0.0
  %817 = vmatpush1.msra.mxu0 0.0
  %818 = vmatprep.subr.mxu0 0.0
  %819 = vmatpush1.msra.mxu0 0.0
  %820 = vmatprep.subr.mxu0 0.0
  %821 = vmatpush1.msra.mxu0 0.0
  %822 = vmatprep.subr.mxu0 0.0
  %823 = vmatpush1.msra.mxu0 0.0
  %824 = vmatprep.subr.mxu0 0.0
  %825 = vmatpush1.msra.mxu0 0.0
  %826 = vmatprep.subr.mxu0 0.0
  %827 = vmatpush1.msra.mxu0 0.0
  %828 = vmatprep.mubr.f32.mxu0 0.0
  %829 = vmatmul.mubr.f32.gmra.mrb[0].mxu0 %v762
  %v830 = vpop.f32.mrb[0].mxu0
  %v831 = vadd.f32 0.0, %v830
  %v832 = vpop.f32.mrb[0].mxu0
  %v833 = vadd.f32 0.0, %v832
  %834 = vdwg.mxu0
  %v835 = vadd.f32 %v833, %v368
  %836 = vrot.lane.b32.xlu0 %v141, 96
  %v837 = vpop.permute.xlu0 %836
  %v839 = vadd.f32 %v835, %v837
  %v840 = vsel %vm372, %v839, -inf
  %841 = vmax.xlane.f32.xlu0 %v840
  %v842 = vpop.xlane.xlu0 %841
  %vm843 = vcmp.ge.f32.partialorder %v839, %v842
  %v844 = vsel %vm843, 1, 0
  %v845 = vcvt.s32.f32 %v844
  %847 = vrot.lane.b32.xlu0 %v845, 16
  %v848 = vpop.permute.xlu0 %847
  %v850 = vmul.f32 %v835, %v848
  %852 = vrot.lane.b32.xlu0 %v850, 112
  %v853 = vpop.permute.xlu0 %852
  %v855 = vsel %vm372, %v853, 0.0
  %856 = vadd.xlane.f32.xlu0 %v855
  %v857 = vpop.xlane.xlu0 %856
  %858 = vrot.lane.b32.xlu0 %v845, 32
  %v859 = vpop.permute.xlu0 %858
  %v861 = vmul.f32 %v835, %v859
  %863 = vrot.lane.b32.xlu0 %v861, 96
  %v864 = vpop.permute.xlu0 %863
  %v866 = vsel %vm372, %v864, 0.0
  %867 = vadd.xlane.f32.xlu0 %v866
  %v868 = vpop.xlane.xlu0 %867
  %869 = vrot.lane.b32.xlu0 %v845, 48
  %v870 = vpop.permute.xlu0 %869
  %v872 = vmul.f32 %v835, %v870
  %874 = vrot.lane.b32.xlu0 %v872, 80
  %v875 = vpop.permute.xlu0 %874
  %v877 = vsel %vm372, %v875, 0.0
  %878 = vadd.xlane.f32.xlu0 %v877
  %v879 = vpop.xlane.xlu0 %878
  %880 = vrot.lane.b32.xlu0 %v845, 64
  %v881 = vpop.permute.xlu0 %880
  %v883 = vmul.f32 %v835, %v881
  %885 = vrot.lane.b32.xlu0 %v883, 64
  %v886 = vpop.permute.xlu0 %885
  %v888 = vsel %vm372, %v886, 0.0
  %889 = vadd.xlane.f32.xlu0 %v888
  %v890 = vpop.xlane.xlu0 %889
  %891 = vrot.lane.b32.xlu0 %v845, 80
  %v892 = vpop.permute.xlu0 %891
  %v894 = vmul.f32 %v835, %v892
  %896 = vrot.lane.b32.xlu0 %v894, 48
  %v897 = vpop.permute.xlu0 %896
  %v899 = vsel %vm372, %v897, 0.0
  %900 = vadd.xlane.f32.xlu0 %v899
  %v901 = vpop.xlane.xlu0 %900
  %v902 = vmax.f32 %v879, -10.0
  %v903 = vmin.f32 %v902, 10.0
  %v904 = vmul.f32 %v903, 1.442695
  %v905 = vpow.pop %v904
  %v906 = vmax.f32 %v890, -10.0
  %v907 = vmin.f32 %v906, 10.0
  %v908 = vmul.f32 %v907, 1.442695
  %v909 = vpow.pop %v908
  %v910 = vtanh.pop %v901
  %v911 = vmul.f32 %v905, %v142
  %v912 = vadd.f32 %v857, %v911
  %v913 = vmul.f32 %v910, %v142
  %v914 = vmul.f32 %v910, %v910
  %v915 = vsub.f32 1.0, %v914
  %v916 = vmax.f32 %v915, 0.0
  %v917 = vrsqrt.pop %v916
  %v918 = vmul.f32 %v916, %v917
  %vm919 = vcmp.eq.f32.partialorder %v916, inf
  %v920 = vsel %vm919, %v916, %v918
  %vm921 = vcmp.eq.f32.partialorder %v916, 0.0
  %v922 = vand.u32 %v916, 2147483648
  %v923 = vsel %vm921, %v922, %v920
  %v924 = vmul.f32 %v923, %v142
  %926 = vrot.lane.b32.xlu0 %v924, 127
  %v927 = vpop.permute.xlu0 %926
  %v929 = vadd.f32 %v913, %v927
  %v930 = vmul.f32 %v909, %v929
  %v931 = vadd.f32 %v868, %v930
  %933 = vset.pattern.permute.xlu0 4
  %934 = vperm.xlu0 %933, %v912
  %v935 = vpop.permute.xlu0 %934
  %v937 = vmul.f32 %v935, %v226
  %939 = vrot.lane.b32.xlu0 %v937, 64
  %v940 = vpop.permute.xlu0 %939
  %v942 = vadd.f32 %v127, %v940
  %v943 = vadd.f32 %v129, %v940
  %945 = vset.pattern.permute.xlu0 4
  %946 = vperm.xlu0 %945, %v931
  %v947 = vpop.permute.xlu0 %946
  %v949 = vmul.f32 %v947, %v241
  %951 = vrot.lane.b32.xlu0 %v949, 64
  %v952 = vpop.permute.xlu0 %951
  %v954 = vadd.f32 %v942, %v952
  %v955 = vadd.f32 %v943, %v952
  %957 = vrot.lane.b32.xlu0 %v831, 64
  %v958 = vpop.permute.xlu0 %957
  %v960 = vadd.f32 %v954, %v958
  %v961 = vadd.f32 %v955, %v958
  %v962 = vxor.u32 %v960, 2147483648
  %v963 = vxor.u32 %v961, 2147483648
  %v964 = vmul.f32 %v962, 1.442695
  %v965 = vpow.pop %v964
  %v966 = vmul.f32 %v963, 1.442695
  %v967 = vpow.pop %v966
  %v968 = vadd.f32 %v965, 1.0
  %v969 = vadd.f32 %v967, 1.0
  %v970 = vrcp.pop %v968
  %v971 = vmul.f32 1.0, %v970
  %v972 = vrcp.pop %v969
  %v973 = vmul.f32 1.0, %v972
  %v974 = vtanh.pop %v961
  %v975 = vmul.f32 %v971, %v752
  %977 = vrot.lane.b32.xlu0 %v974, 64
  %v978 = vpop.permute.xlu0 %977
  %v980 = vmul.f32 %v971, %v978
  %982 = vrot.lane.b32.xlu0 %v980, 32
  %v983 = vpop.permute.xlu0 %982
  %v985 = vadd.f32 %v975, %v983
  %v986 = vtanh.pop %v985
  %988 = vrot.lane.b32.xlu0 %v986, 64
  %v989 = vpop.permute.xlu0 %988
  %v991 = vmul.f32 %v973, %v989
  %993 = vrot.lane.b32.xlu0 %v991, 96
  %v994 = vpop.permute.xlu0 %993
  %v995 = vsel %vm143, %v994, 0
  %997 = vmatprep.subr.mxu0 %v133
  %998 = vmatpush1.msra.mxu0 %v132
  %999 = vmatprep.subr.mxu0 %v135
  %1000 = vmatpush1.msra.mxu0 %v134
  %1001 = vmatprep.subr.mxu0 %v137
  %1002 = vmatpush1.msra.mxu0 %v136
  %1003 = vmatprep.subr.mxu0 %v139
  %1004 = vmatpush1.msra.mxu0 %v138
  %1005 = vmatprep.subr.mxu0 0.0
  %1006 = vmatpush1.msra.mxu0 0.0
  %1007 = vmatprep.subr.mxu0 0.0
  %1008 = vmatpush1.msra.mxu0 0.0
  %1009 = vmatprep.subr.mxu0 0.0
  %1010 = vmatpush1.msra.mxu0 0.0
  %1011 = vmatprep.subr.mxu0 0.0
  %1012 = vmatpush1.msra.mxu0 0.0
  %1013 = vmatprep.subr.mxu0 0.0
  %1014 = vmatpush1.msra.mxu0 0.0
  %1015 = vmatprep.subr.mxu0 0.0
  %1016 = vmatpush1.msra.mxu0 0.0
  %1017 = vmatprep.subr.mxu0 0.0
  %1018 = vmatpush1.msra.mxu0 0.0
  %1019 = vmatprep.subr.mxu0 0.0
  %1020 = vmatpush1.msra.mxu0 0.0
  %1021 = vmatprep.subr.mxu0 0.0
  %1022 = vmatpush1.msra.mxu0 0.0
  %1023 = vmatprep.subr.mxu0 0.0
  %1024 = vmatpush1.msra.mxu0 0.0
  %1025 = vmatprep.subr.mxu0 0.0
  %1026 = vmatpush1.msra.mxu0 0.0
  %1027 = vmatprep.subr.mxu0 0.0
  %1028 = vmatpush1.msra.mxu0 0.0
  %1029 = vmatprep.subr.mxu0 0.0
  %1030 = vmatpush1.msra.mxu0 0.0
  %1031 = vmatprep.subr.mxu0 0.0
  %1032 = vmatpush1.msra.mxu0 0.0
  %1033 = vmatprep.subr.mxu0 0.0
  %1034 = vmatpush1.msra.mxu0 0.0
  %1035 = vmatprep.subr.mxu0 0.0
  %1036 = vmatpush1.msra.mxu0 0.0
  %1037 = vmatprep.subr.mxu0 0.0
  %1038 = vmatpush1.msra.mxu0 0.0
  %1039 = vmatprep.subr.mxu0 0.0
  %1040 = vmatpush1.msra.mxu0 0.0
  %1041 = vmatprep.subr.mxu0 0.0
  %1042 = vmatpush1.msra.mxu0 0.0
  %1043 = vmatprep.subr.mxu0 0.0
  %1044 = vmatpush1.msra.mxu0 0.0
  %1045 = vmatprep.subr.mxu0 0.0
  %1046 = vmatpush1.msra.mxu0 0.0
  %1047 = vmatprep.subr.mxu0 0.0
  %1048 = vmatpush1.msra.mxu0 0.0
  %1049 = vmatprep.subr.mxu0 0.0
  %1050 = vmatpush1.msra.mxu0 0.0
  %1051 = vmatprep.subr.mxu0 0.0
  %1052 = vmatpush1.msra.mxu0 0.0
  %1053 = vmatprep.subr.mxu0 0.0
  %1054 = vmatpush1.msra.mxu0 0.0
  %1055 = vmatprep.subr.mxu0 0.0
  %1056 = vmatpush1.msra.mxu0 0.0
  %1057 = vmatprep.subr.mxu0 0.0
  %1058 = vmatpush1.msra.mxu0 0.0
  %1059 = vmatprep.subr.mxu0 0.0
  %1060 = vmatpush1.msra.mxu0 0.0
  %1061 = vmatprep.mubr.f32.mxu0 0.0
  %1062 = vmatmul.mubr.f32.gmra.mrb[0].mxu0 %v995
  %v1063 = vpop.f32.mrb[0].mxu0
  %v1064 = vpop.f32.mrb[0].mxu0
  %v1065 = vadd.f32 0.0, %v1064
  %1066 = vdwg.mxu0
  %v1067 = vadd.f32 %v1065, %v368
  %1068 = vrot.lane.b32.xlu0 %v141, 80
  %v1069 = vpop.permute.xlu0 %1068
  %v1071 = vadd.f32 %v1067, %v1069
  %v1072 = vsel %vm372, %v1071, -inf
  %1073 = vmax.xlane.f32.xlu0 %v1072
  %v1074 = vpop.xlane.xlu0 %1073
  %vm1075 = vcmp.ge.f32.partialorder %v1071, %v1074
  %v1076 = vsel %vm1075, 1, 0
  %v1077 = vcvt.s32.f32 %v1076
  %1079 = vrot.lane.b32.xlu0 %v1077, 16
  %v1080 = vpop.permute.xlu0 %1079
  %v1082 = vmul.f32 %v1067, %v1080
  %1084 = vrot.lane.b32.xlu0 %v1082, 112
  %v1085 = vpop.permute.xlu0 %1084
  %v1087 = vsel %vm372, %v1085, 0.0
  %1088 = vadd.xlane.f32.xlu0 %v1087
  %v1089 = vpop.xlane.xlu0 %1088
  %1090 = vrot.lane.b32.xlu0 %v1077, 32
  %v1091 = vpop.permute.xlu0 %1090
  %v1093 = vmul.f32 %v1067, %v1091
  %1095 = vrot.lane.b32.xlu0 %v1093, 96
  %v1096 = vpop.permute.xlu0 %1095
  %v1098 = vsel %vm372, %v1096, 0.0
  %1099 = vadd.xlane.f32.xlu0 %v1098
  %v1100 = vpop.xlane.xlu0 %1099
  %1101 = vrot.lane.b32.xlu0 %v1077, 48
  %v1102 = vpop.permute.xlu0 %1101
  %v1104 = vmul.f32 %v1067, %v1102
  %1106 = vrot.lane.b32.xlu0 %v1104, 80
  %v1107 = vpop.permute.xlu0 %1106
  %v1109 = vsel %vm372, %v1107, 0.0
  %1110 = vadd.xlane.f32.xlu0 %v1109
  %v1111 = vpop.xlane.xlu0 %1110
  %1112 = vrot.lane.b32.xlu0 %v1077, 64
  %v1113 = vpop.permute.xlu0 %1112
  %v1115 = vmul.f32 %v1067, %v1113
  %1117 = vrot.lane.b32.xlu0 %v1115, 64
  %v1118 = vpop.permute.xlu0 %1117
  %v1120 = vsel %vm372, %v1118, 0.0
  %1121 = vadd.xlane.f32.xlu0 %v1120
  %v1122 = vpop.xlane.xlu0 %1121
  %1123 = vrot.lane.b32.xlu0 %v1077, 80
  %v1124 = vpop.permute.xlu0 %1123
  %v1126 = vmul.f32 %v1067, %v1124
  %1128 = vrot.lane.b32.xlu0 %v1126, 48
  %v1129 = vpop.permute.xlu0 %1128
  %v1131 = vsel %vm372, %v1129, 0.0
  %1132 = vadd.xlane.f32.xlu0 %v1131
  %v1133 = vpop.xlane.xlu0 %1132
  %v1134 = vmax.f32 %v1111, -10.0
  %v1135 = vmin.f32 %v1134, 10.0
  %v1136 = vmul.f32 %v1135, 1.442695
  %v1137 = vpow.pop %v1136
  %v1138 = vmax.f32 %v1122, -10.0
  %v1139 = vmin.f32 %v1138, 10.0
  %v1140 = vmul.f32 %v1139, 1.442695
  %v1141 = vpow.pop %v1140
  %v1142 = vtanh.pop %v1133
  %v1143 = vmul.f32 %v1137, %v142
  %v1144 = vadd.f32 %v1089, %v1143
  %v1145 = vmul.f32 %v1142, %v142
  %v1146 = vmul.f32 %v1142, %v1142
  %v1147 = vsub.f32 1.0, %v1146
  %v1148 = vmax.f32 %v1147, 0.0
  %v1149 = vrsqrt.pop %v1148
  %v1150 = vmul.f32 %v1148, %v1149
  %vm1151 = vcmp.eq.f32.partialorder %v1148, inf
  %v1152 = vsel %vm1151, %v1148, %v1150
  %vm1153 = vcmp.eq.f32.partialorder %v1148, 0.0
  %v1154 = vand.u32 %v1148, 2147483648
  %v1155 = vsel %vm1153, %v1154, %v1152
  %v1156 = vmul.f32 %v1155, %v142
  %1158 = vrot.lane.b32.xlu0 %v1156, 127
  %v1159 = vpop.permute.xlu0 %1158
  %v1161 = vadd.f32 %v1145, %v1159
  %v1162 = vmul.f32 %v1141, %v1161
  %v1163 = vadd.f32 %v1100, %v1162
  %1164 = vrot.lane.b32.xlu0 %v464, 1
  %v1165 = vpop.permute.xlu0 %1164
  %1167 = vrot.lane.b32.xlu0 %v698, 1
  %v1168 = vpop.permute.xlu0 %1167
  %1170 = vrot.lane.b32.xlu0 %v931, 1
  %v1171 = vpop.permute.xlu0 %1170
  %1174 = vrot.lane.b32.xlu0 %v1163, 1
  %v1175 = vpop.permute.xlu0 %1174
  %vm1177 = vcmask 7168
  %v1178 = vsel %vm1177, %v445, %v1165
  %vm1179 = vcmask 15360
  %v1180 = vsel %vm1179, %v1178, %v679
  %vm1181 = vcmask 23552
  %v1182 = vsel %vm1181, %v1180, %v1168
  %vm1183 = vcmask 31744
  %v1184 = vsel %vm1183, %v1182, %v912
  %vm1185 = vcmask 39936
  %v1186 = vsel %vm1185, %v1184, %v1171
  %vm1187 = vcmask 48128
  %v1188 = vsel %vm1187, %v1186, %v1144
  %vm1189 = vcmask 56320
  %v1190 = vsel %vm1189, %v1188, %v1175
  %vm1191 = vcmask 64512
  %1192 = vst.msk [vmem:[%s9] sm:$0xff] %vm1191, %v1190
  // Predicated region
  $region38: #{decoder_forward.3} parent=0 // pred_check
    _
  $region39: #{decoder_forward.3} parent=0 // pred_check_branch
    %1194 = sbr.rel (0) target = $region41
  $region40: #{decoder_forward.3} parent=0 // pred_region
    _
  $region41: #{decoder_forward.3} parent=0 // pred_fallthru
    _
  // Predicated region
  $region42: #{decoder_forward.3} parent=0 // pred_check
    _
  $region43: #{decoder_forward.3} parent=0 // pred_check_branch
    %1196 = sbr.rel (0) target = $region45
  $region44: #{decoder_forward.3} parent=0 // pred_region
    _
  $region45: #{decoder_forward.3} parent=0 // pred_fallthru
    _

</llo_original>
